<compile_context>
chip_gen: v7x
topology: tpu7x:2x2x1
jax: 0.10.0
libtpu: 0.0.40
codegen_flags: <defaults>
</compile_context>

<pallas_src>
import functools

import jax
import jax.numpy as jnp
from jax.experimental import pallas as pl
from jax.experimental.pallas import tpu as pltpu


def _round_up(x, m):
    return ((x + m - 1) // m) * m


def gen_kernel(x_ref,
               w1_ref, t1_ref,
               w2_ref, t2_ref,
               w3_ref, t3_ref,
               w4_ref, b4_ref,
               o_ref):
    # Block 1: (ConvT + BN + ReLU) folded -> relu(x @ w1_fold + t1_fold)
    # MXU in bf16, f32 accumulate; epilogue + downcast fused in one expression.
    h = jnp.dot(x_ref[...].astype(jnp.bfloat16), w1_ref[...],
                preferred_element_type=jnp.float32)
    h = jnp.maximum(h + t1_ref[...], 0.0).astype(jnp.bfloat16)
    # Block 2: (ConvT(256,512) + BN + ReLU) folded
    h = jnp.dot(h, w2_ref[...], preferred_element_type=jnp.float32)
    h = jnp.maximum(h + t2_ref[...], 0.0).astype(jnp.bfloat16)
    # Block 3: (ConvT(512,1024) + BN + ReLU) folded
    h = jnp.dot(h, w3_ref[...], preferred_element_type=jnp.float32)
    h = jnp.maximum(h + t3_ref[...], 0.0).astype(jnp.bfloat16)
    # Output layer: ConvT(1024, out) + Sigmoid
    h = jnp.dot(h, w4_ref[...], preferred_element_type=jnp.float32)
    o_ref[...] = jax.nn.sigmoid(h + b4_ref[...]).astype(o_ref.dtype)


def init_raw_params(key, input_dim, output_dim):
    """Random parameters with the exact shapes of the nn.Module:
       ConvTranspose2d(k=1): weight (C_in, C_out, 1, 1), bias (C_out,);
       BatchNorm2d: gamma / beta / running_mean / running_var (C_out,)."""
    dims = [input_dim, 256, 512, 1024, output_dim]
    raw = []
    for i in range(4):
        c_in, c_out = dims[i], dims[i + 1]
        key, kw, kb = jax.random.split(key, 3)
        bound = 1.0 / float(jnp.sqrt(float(c_in)))
        w = jax.random.uniform(kw, (c_in, c_out, 1, 1), jnp.float32, -bound, bound)
        b = jax.random.uniform(kb, (c_out,), jnp.float32, -bound, bound)
        if i < 3:
            key, kg, kbt, km, kv = jax.random.split(key, 5)
            gamma = jax.random.uniform(kg, (c_out,), jnp.float32, 0.5, 1.5)
            beta = jax.random.uniform(kbt, (c_out,), jnp.float32, -0.1, 0.1)
            mean = jax.random.uniform(km, (c_out,), jnp.float32, -0.1, 0.1)
            var = jax.random.uniform(kv, (c_out,), jnp.float32, 0.5, 1.5)
            raw.append((w, b, gamma, beta, mean, var))
        else:
            raw.append((w, b))
    return raw


def prepare_params(raw_params, eps=1e-5):
    """One-time (outside the jitted forward) weight preparation:
      * squeeze 1x1 ConvTranspose2d kernels to dense (C_in, C_out) matrices,
      * fold eval-mode BN into weights/bias:  y = relu(x @ (W*scale) + (b*scale+shift)),
        with W*scale done in f32 and cast to bf16 exactly once,
      * zero-pad layer-1 K and layer-4 N to multiples of 128 (MXU / lane-dense stores),
      * cast matmul weights to bf16 (half the resident-weight bytes); per-channel
        shift rows stay f32."""
    folded = []
    for i, layer in enumerate(raw_params):
        if i < 3:
            w, b, gamma, beta, mean, var = layer
            w = w.reshape(w.shape[0], w.shape[1])                     # (C_in, C_out)
            scale = gamma / jnp.sqrt(var + eps)                       # (C_out,)
            shift = beta - mean * scale
            w_fold = (w * scale[None, :]).astype(jnp.bfloat16)        # f32 mul, one cast
            t_fold = (b * scale + shift)[None, :].astype(jnp.float32)  # (1, C_out)
            folded.append((w_fold, t_fold))
        else:
            w, b = layer
            folded.append((w.reshape(w.shape[0], w.shape[1]), b[None, :]))
    (w1, t1), (w2, t2), (w3, t3), (w4, b4) = folded

    # Pad layer-1 contraction dim with zeros (exact no-op) to a multiple of 128.
    in_dim = w1.shape[0]
    k_pad = _round_up(max(in_dim, 128), 128)
    if k_pad != in_dim:
        w1 = jnp.pad(w1, ((0, k_pad - in_dim), (0, 0)))

    # Pad the output channel dim to a multiple of 128 (lane-dense vst, MXU-aligned N).
    out_dim = w4.shape[1]
    out_pad = _round_up(max(out_dim, 128), 128)
    if out_pad != out_dim:
        w4 = jnp.pad(w4, ((0, 0), (0, out_pad - out_dim)))
        b4 = jnp.pad(b4, ((0, 0), (0, out_pad - out_dim)))
    w4 = w4.astype(jnp.bfloat16)
    b4 = b4.astype(jnp.float32)

    params = ((w1, t1), (w2, t2), (w3, t3), (w4, b4))
    return jax.device_put(params)


@functools.partial(jax.jit, static_argnames=("output_dim", "block_b", "out_dtype"))
def conv_generator_forward(x, params, *, output_dim, block_b=512,
                           out_dtype=jnp.float32):
    """x: (B, input_dim) f32; params from prepare_params().
    Returns (B, output_dim) == module(x).view(B, -1)."""
    (w1, t1), (w2, t2), (w3, t3), (w4, b4) = params
    B, in_dim = x.shape
    k_pad = w1.shape[0]
    out_pad = w4.shape[1]

    # Per-call: only pad the input K dim to match the pre-padded w1.
    if k_pad != in_dim:
        x = jnp.pad(x, ((0, 0), (0, k_pad - in_dim)))

    # Batch tile: multiple of 8, capped at block_b (512 keeps peak VMEM ~7-8 MiB,
    # safe under v5e's 16 MiB scoped default), and >= 2 grid steps whenever B > 8
    # so the "parallel" batch axis shards across both v7x TensorCores.
    if B <= 8:
        tb = B
    else:
        tb = max(8, min(block_b, _round_up(pl.cdiv(B, 2), 8)))
    b_pad = _round_up(B, tb)
    if b_pad != B:
        x = jnp.pad(x, ((0, b_pad - B), (0, 0)))
    grid = (b_pad // tb,)

    x_spec = pl.BlockSpec((tb, k_pad), lambda i: (i, 0))
    out_spec = pl.BlockSpec((tb, out_pad), lambda i: (i, 0))

    def resident(arr):
        # Whole array as one block with a constant index_map: stays VMEM-resident
        # across batch-tile grid steps (no per-step re-DMA).
        # TODO(synk): pipeline_mode=pl.Buffered(1) would drop the redundant second
        # buffer for these constant operands (saves ~1.6 MiB VMEM on v7x); left at
        # the default for portability.
        return pl.BlockSpec(arr.shape, lambda i: (0, 0))

    weight_args = (w1, t1, w2, t2, w3, t3, w4, b4)

    flops = 2 * b_pad * (k_pad * 256 + 256 * 512 + 512 * 1024 + 1024 * out_pad)
    weight_bytes = sum(int(a.size) * a.dtype.itemsize for a in weight_args)
    bytes_accessed = (weight_bytes
                      + b_pad * k_pad * x.dtype.itemsize
                      + b_pad * out_pad * jnp.dtype(out_dtype).itemsize)
    cost = pl.CostEstimate(flops=flops,
                           transcendentals=b_pad * out_pad,   # sigmoid exp
                           bytes_accessed=bytes_accessed)

    out = pl.pallas_call(
        gen_kernel,
        out_shape=jax.ShapeDtypeStruct((b_pad, out_pad), out_dtype),
        grid=grid,
        in_specs=[x_spec] + [resident(a) for a in weight_args],
        out_specs=out_spec,
        compiler_params=pltpu.CompilerParams(
            dimension_semantics=("parallel",)),
        cost_estimate=cost,
    )(x, *weight_args)

    if b_pad != B:
        out = out[:B]
    if out_pad != output_dim:
        out = out[:, :output_dim]
    return out


def reference_forward(x, raw_params, eps=1e-5):
    """Pure-JAX f32 reference of the PyTorch module (eval-mode BatchNorm)."""
    h = x
    for i, layer in enumerate(raw_params):
        if i < 3:
            w, b, gamma, beta, mean, var = layer
            h = h @ w.reshape(w.shape[0], w.shape[1]) + b[None, :]
            h = (h - mean[None, :]) / jnp.sqrt(var[None, :] + eps)
            h = h * gamma[None, :] + beta[None, :]
            h = jnp.maximum(h, 0.0)
        else:
            w, b = layer
            h = h @ w.reshape(w.shape[0], w.shape[1]) + b[None, :]
            h = jax.nn.sigmoid(h)
    return h


if __name__ == "__main__":
    key = jax.random.PRNGKey(0)
    key, kx = jax.random.split(key)

    batch = 8
    input_dim = 64     # latent "input_dimensions"
    output_dim = 128   # "output_dimensions"

    x = jax.random.normal(kx, (batch, input_dim), jnp.float32)
    raw = init_raw_params(key, input_dim, output_dim)
    params = prepare_params(raw)   # one-time: BN fold + bf16 cast + 128-padding

    out = conv_generator_forward(x, params, output_dim=output_dim)
    out = jax.block_until_ready(out)

    ref = reference_forward(x, raw)
    assert out.shape == (batch, output_dim), out.shape
    assert bool(jnp.all(jnp.isfinite(out))), "non-finite output"
    max_err = float(jnp.max(jnp.abs(out.astype(jnp.float32) - ref)))
    assert max_err < 2e-2, max_err

    print("KERNEL_OK")
</pallas_src>

<mosaic_0001>
module attributes {stable_mosaic.version = 11 : i64} {
  func.func @gen_kernel(%arg0: i32, %arg1: memref<8x128xf32, #tpu.memory_space<vmem>>, %arg2: memref<128x256xbf16, #tpu.memory_space<vmem>>, %arg3: memref<1x256xf32, #tpu.memory_space<vmem>>, %arg4: memref<256x512xbf16, #tpu.memory_space<vmem>>, %arg5: memref<1x512xf32, #tpu.memory_space<vmem>>, %arg6: memref<512x1024xbf16, #tpu.memory_space<vmem>>, %arg7: memref<1x1024xf32, #tpu.memory_space<vmem>>, %arg8: memref<1024x128xbf16, #tpu.memory_space<vmem>>, %arg9: memref<1x128xf32, #tpu.memory_space<vmem>>, %arg10: memref<8x128xf32, #tpu.memory_space<vmem>>) attributes {dimension_semantics = [#tpu.dimension_semantics<parallel>], iteration_bounds = array<i64: 1>, scalar_prefetch = 0 : i64, scratch_operands = 0 : i64, tpu.core_type = #tpu.core_type<tc>, window_params = [{transform_indices = @transform_0, window_bounds = array<i64: 8, 128>}, {pipeline_mode = #tpu.pipeline_mode<synchronous>, transform_indices = @transform_1, window_bounds = array<i64: 128, 256>}, {pipeline_mode = #tpu.pipeline_mode<synchronous>, transform_indices = @transform_2, window_bounds = array<i64: 1, 256>}, {pipeline_mode = #tpu.pipeline_mode<synchronous>, transform_indices = @transform_3, window_bounds = array<i64: 256, 512>}, {pipeline_mode = #tpu.pipeline_mode<synchronous>, transform_indices = @transform_4, window_bounds = array<i64: 1, 512>}, {pipeline_mode = #tpu.pipeline_mode<synchronous>, transform_indices = @transform_5, window_bounds = array<i64: 512, 1024>}, {pipeline_mode = #tpu.pipeline_mode<synchronous>, transform_indices = @transform_6, window_bounds = array<i64: 1, 1024>}, {pipeline_mode = #tpu.pipeline_mode<synchronous>, transform_indices = @transform_7, window_bounds = array<i64: 1024, 128>}, {pipeline_mode = #tpu.pipeline_mode<synchronous>, transform_indices = @transform_8, window_bounds = array<i64: 1, 128>}, {transform_indices = @transform_9, window_bounds = array<i64: 8, 128>}]} {
    %c0 = arith.constant 0 : index
    %c0_0 = arith.constant 0 : index
    %0 = vector.load %arg1[%c0, %c0_0] : memref<8x128xf32, #tpu.memory_space<vmem>>, vector<8x128xf32>
    %1 = arith.truncf %0 : vector<8x128xf32> to vector<8x128xbf16>
    %c0_1 = arith.constant 0 : index
    %c0_2 = arith.constant 0 : index
    %2 = vector.load %arg2[%c0_1, %c0_2] : memref<128x256xbf16, #tpu.memory_space<vmem>>, vector<128x256xbf16>
    %cst = arith.constant dense<0.000000e+00> : vector<8x256xf32>
    %3 = tpu.matmul %1, %2, %cst {dimension_numbers = #tpu.dot_dimension_numbers<[1], [0], [0], [1], [0, 0, 1, 1], [], []>} : vector<8x128xbf16>, vector<128x256xbf16>, vector<8x256xf32> -> vector<8x256xf32>
    %c0_3 = arith.constant 0 : index
    %c0_4 = arith.constant 0 : index
    %4 = vector.load %arg3[%c0_3, %c0_4] : memref<1x256xf32, #tpu.memory_space<vmem>>, vector<1x256xf32>
    %5 = vector.broadcast %4 : vector<1x256xf32> to vector<8x256xf32>
    %6 = arith.addf %3, %5 : vector<8x256xf32>
    %cst_5 = arith.constant 0.000000e+00 : f32
    %7 = vector.broadcast %cst_5 : f32 to vector<8x256xf32>
    %8 = arith.maximumf %6, %7 : vector<8x256xf32>
    %9 = arith.truncf %8 : vector<8x256xf32> to vector<8x256xbf16>
    %c0_6 = arith.constant 0 : index
    %c0_7 = arith.constant 0 : index
    %10 = vector.load %arg4[%c0_6, %c0_7] : memref<256x512xbf16, #tpu.memory_space<vmem>>, vector<256x512xbf16>
    %cst_8 = arith.constant dense<0.000000e+00> : vector<8x512xf32>
    %11 = tpu.matmul %9, %10, %cst_8 {dimension_numbers = #tpu.dot_dimension_numbers<[1], [0], [0], [1], [0, 0, 1, 1], [], []>} : vector<8x256xbf16>, vector<256x512xbf16>, vector<8x512xf32> -> vector<8x512xf32>
    %c0_9 = arith.constant 0 : index
    %c0_10 = arith.constant 0 : index
    %12 = vector.load %arg5[%c0_9, %c0_10] : memref<1x512xf32, #tpu.memory_space<vmem>>, vector<1x512xf32>
    %13 = vector.broadcast %12 : vector<1x512xf32> to vector<8x512xf32>
    %14 = arith.addf %11, %13 : vector<8x512xf32>
    %cst_11 = arith.constant 0.000000e+00 : f32
    %15 = vector.broadcast %cst_11 : f32 to vector<8x512xf32>
    %16 = arith.maximumf %14, %15 : vector<8x512xf32>
    %17 = arith.truncf %16 : vector<8x512xf32> to vector<8x512xbf16>
    %c0_12 = arith.constant 0 : index
    %c0_13 = arith.constant 0 : index
    %18 = vector.load %arg6[%c0_12, %c0_13] : memref<512x1024xbf16, #tpu.memory_space<vmem>>, vector<512x1024xbf16>
    %cst_14 = arith.constant dense<0.000000e+00> : vector<8x1024xf32>
    %19 = tpu.matmul %17, %18, %cst_14 {dimension_numbers = #tpu.dot_dimension_numbers<[1], [0], [0], [1], [0, 0, 1, 1], [], []>} : vector<8x512xbf16>, vector<512x1024xbf16>, vector<8x1024xf32> -> vector<8x1024xf32>
    %c0_15 = arith.constant 0 : index
    %c0_16 = arith.constant 0 : index
    %20 = vector.load %arg7[%c0_15, %c0_16] : memref<1x1024xf32, #tpu.memory_space<vmem>>, vector<1x1024xf32>
    %21 = vector.broadcast %20 : vector<1x1024xf32> to vector<8x1024xf32>
    %22 = arith.addf %19, %21 : vector<8x1024xf32>
    %cst_17 = arith.constant 0.000000e+00 : f32
    %23 = vector.broadcast %cst_17 : f32 to vector<8x1024xf32>
    %24 = arith.maximumf %22, %23 : vector<8x1024xf32>
    %25 = arith.truncf %24 : vector<8x1024xf32> to vector<8x1024xbf16>
    %c0_18 = arith.constant 0 : index
    %c0_19 = arith.constant 0 : index
    %26 = vector.load %arg8[%c0_18, %c0_19] : memref<1024x128xbf16, #tpu.memory_space<vmem>>, vector<1024x128xbf16>
    %cst_20 = arith.constant dense<0.000000e+00> : vector<8x128xf32>
    %27 = tpu.matmul %25, %26, %cst_20 {dimension_numbers = #tpu.dot_dimension_numbers<[1], [0], [0], [1], [0, 0, 1, 1], [], []>} : vector<8x1024xbf16>, vector<1024x128xbf16>, vector<8x128xf32> -> vector<8x128xf32>
    %c0_21 = arith.constant 0 : index
    %c0_22 = arith.constant 0 : index
    %28 = vector.load %arg9[%c0_21, %c0_22] : memref<1x128xf32, #tpu.memory_space<vmem>>, vector<1x128xf32>
    %29 = vector.broadcast %28 : vector<1x128xf32> to vector<8x128xf32>
    %30 = arith.addf %27, %29 : vector<8x128xf32>
    %31 = arith.negf %30 : vector<8x128xf32>
    %32 = math.exp %31 : vector<8x128xf32>
    %cst_23 = arith.constant 1.000000e+00 : f32
    %33 = vector.broadcast %cst_23 : f32 to vector<8x128xf32>
    %34 = arith.addf %33, %32 : vector<8x128xf32>
    %35 = arith.divf %33, %34 : vector<8x128xf32>
    %c0_24 = arith.constant 0 : index
    %c0_25 = arith.constant 0 : index
    %36 = vector.load %arg10[%c0_24, %c0_25] : memref<8x128xf32, #tpu.memory_space<vmem>>, vector<8x128xf32>
    tpu.vector_store %arg10[%c0_24, %c0_25], %35 {strides = array<i32>} : memref<8x128xf32, #tpu.memory_space<vmem>>, vector<8x128xf32>,
    return
  }
  func.func @transform_0(%arg0: i32) -> (i32, i32) {
    %c0_i32 = arith.constant 0 : i32
    %c0_i32_0 = arith.constant 0 : i32
    return %arg0, %c0_i32 : i32, i32
  }
  func.func @transform_1(%arg0: i32) -> (i32, i32) {
    %c0_i32 = arith.constant 0 : i32
    %c0_i32_0 = arith.constant 0 : i32
    %c0_i32_1 = arith.constant 0 : i32
    return %c0_i32, %c0_i32_0 : i32, i32
  }
  func.func @transform_2(%arg0: i32) -> (i32, i32) {
    %c0_i32 = arith.constant 0 : i32
    %c0_i32_0 = arith.constant 0 : i32
    %c0_i32_1 = arith.constant 0 : i32
    return %c0_i32, %c0_i32_0 : i32, i32
  }
  func.func @transform_3(%arg0: i32) -> (i32, i32) {
    %c0_i32 = arith.constant 0 : i32
    %c0_i32_0 = arith.constant 0 : i32
    %c0_i32_1 = arith.constant 0 : i32
    return %c0_i32, %c0_i32_0 : i32, i32
  }
  func.func @transform_4(%arg0: i32) -> (i32, i32) {
    %c0_i32 = arith.constant 0 : i32
    %c0_i32_0 = arith.constant 0 : i32
    %c0_i32_1 = arith.constant 0 : i32
    return %c0_i32, %c0_i32_0 : i32, i32
  }
  func.func @transform_5(%arg0: i32) -> (i32, i32) {
    %c0_i32 = arith.constant 0 : i32
    %c0_i32_0 = arith.constant 0 : i32
    %c0_i32_1 = arith.constant 0 : i32
    return %c0_i32, %c0_i32_0 : i32, i32
  }
  func.func @transform_6(%arg0: i32) -> (i32, i32) {
    %c0_i32 = arith.constant 0 : i32
    %c0_i32_0 = arith.constant 0 : i32
    %c0_i32_1 = arith.constant 0 : i32
    return %c0_i32, %c0_i32_0 : i32, i32
  }
  func.func @transform_7(%arg0: i32) -> (i32, i32) {
    %c0_i32 = arith.constant 0 : i32
    %c0_i32_0 = arith.constant 0 : i32
    %c0_i32_1 = arith.constant 0 : i32
    return %c0_i32, %c0_i32_0 : i32, i32
  }
  func.func @transform_8(%arg0: i32) -> (i32, i32) {
    %c0_i32 = arith.constant 0 : i32
    %c0_i32_0 = arith.constant 0 : i32
    %c0_i32_1 = arith.constant 0 : i32
    return %c0_i32, %c0_i32_0 : i32, i32
  }
  func.func @transform_9(%arg0: i32) -> (i32, i32) {
    %c0_i32 = arith.constant 0 : i32
    %c0_i32_0 = arith.constant 0 : i32
    return %arg0, %c0_i32 : i32, i32
  }
}

</mosaic_0001>

<llo_original>
// kernel: conv_generator_forward.1
$region0: #{conv_generator_forward.1}
  #allocation0 [shape = 'u32[]', space=smem, size = 0x4, offset = 0x4, fixed_abs, tag = 'smem constant byte address 0x4 - core index']
  #allocation1 [shape = 'u32[144,128]{1,0:T(1,128)}', space=vmem, size = 0x12000, scoped, tag = 'internal scratch']
  %s0 = inlined_call_operand.vmem [shape: f32[8,128], index: 0, kind: input, shape index: {}]
  %s1 = inlined_call_operand.hbm [shape: bf16[128,256], index: 1, kind: input, shape index: {}]
  %s2 = inlined_call_operand.vmem [shape: f32[1,256], index: 2, kind: input, shape index: {}]
  %s3 = inlined_call_operand.hbm [shape: bf16[256,512], index: 3, kind: input, shape index: {}]
  %s4 = inlined_call_operand.vmem [shape: f32[1,512], index: 4, kind: input, shape index: {}]
  %s5 = inlined_call_operand.hbm [shape: bf16[512,1024], index: 5, kind: input, shape index: {}]
  %s6 = inlined_call_operand.vmem [shape: f32[1,1024], index: 6, kind: input, shape index: {}]
  %s7 = inlined_call_operand.hbm [shape: bf16[1024,128], index: 7, kind: input, shape index: {}]
  %s8 = inlined_call_operand.vmem [shape: f32[1,128], index: 8, kind: input, shape index: {}]
  %s9 = inlined_call_operand.hbm [shape: f32[8,128], index: 9, kind: output, shape index: {}]
  %s10 = sld [smem:[#allocation0]]
  $region62: #{conv_generator_forward.1} parent=0
    _
  %s12 = ssub.s32 1, %s10
  %s13 = scalar_select 0, %s12, %s10
  $region1: #{conv_generator_forward.1} parent=0
    #allocation2 [shape = 'u8[65536]{0}', space=vmem, size = 0x10000, scoped, tag = 'input window, operand 1, single buffered']
    #allocation3 [shape = 's32[1]{0}', space=sflag, size = 0x4, scoped, tag = 'scoped memory for conv_generator_forward.1']
    #allocation4 [shape = 's32[1]{0}', space=sflag, size = 0x4, scoped, tag = 'scoped memory for conv_generator_forward.1']
    #allocation5 [shape = 'u8[262144]{0}', space=vmem, size = 0x40000, scoped, tag = 'input window, operand 3, single buffered']
    #allocation6 [shape = 's32[1]{0}', space=sflag, size = 0x4, scoped, tag = 'scoped memory for conv_generator_forward.1']
    #allocation7 [shape = 'u8[1048576]{0}', space=vmem, size = 0x100000, scoped, tag = 'input window, operand 5, single buffered']
    #allocation8 [shape = 'u8[262144]{0}', space=vmem, size = 0x40000, scoped, tag = 'input window, operand 7, single buffered']
    #allocation9 [shape = 's32[1]{0}', space=sflag, size = 0x4, scoped, tag = 'scoped memory for conv_generator_forward.1']
    #allocation10 [shape = 'u8[4096]{0}', space=vmem, size = 0x1000, scoped, tag = 'output window, operand 0, single buffered']
    %14 = vsyncpa [#allocation3], 0
    %15 = vsyncpa [#allocation6], 0
    %16 = vsyncpa [#allocation9], 0
    %17 = vsyncpa [#allocation4], 0
    // Predicated region
    $region2: #{conv_generator_forward.1} parent=1 // pred_check
      _
    $region3: #{conv_generator_forward.1} parent=1 // pred_check_branch
      %19 = sbr.rel (0) target = $region5
    $region4: #{conv_generator_forward.1} parent=1 // pred_region
      _
    $region5: #{conv_generator_forward.1} parent=1 // pred_fallthru
      _
    // Predicated region
    $region6: #{conv_generator_forward.1} parent=1 // pred_check
      _
    $region7: #{conv_generator_forward.1} parent=1 // pred_check_branch
      %21 = sbr.rel (0) target = $region9
    $region8: #{conv_generator_forward.1} parent=1 // pred_region
      %s23 = ssub.s32 2048, 2048
      %24 = vsyncadd [#allocation3], %s23
      %s25 = sshll.u32 [#allocation2], 4
      %s26 = int_to_ptr.vmem [resolvable:$true] %s25
      %31 = dma.hbm_to_vmem [thread:$0]  %s1, 2048, %s26, [#allocation3], 128, 128, 8
    $region9: #{conv_generator_forward.1} parent=1 // pred_fallthru
      _
    // Predicated region
    $region10: #{conv_generator_forward.1} parent=1 // pred_check
      _
    $region11: #{conv_generator_forward.1} parent=1 // pred_check_branch
      %33 = sbr.rel (0) target = $region13
    $region12: #{conv_generator_forward.1} parent=1 // pred_region
      _
    $region13: #{conv_generator_forward.1} parent=1 // pred_fallthru
      _
    // Predicated region
    $region14: #{conv_generator_forward.1} parent=1 // pred_check
      _
    $region15: #{conv_generator_forward.1} parent=1 // pred_check_branch
      %35 = sbr.rel (0) target = $region17
    $region16: #{conv_generator_forward.1} parent=1 // pred_region
      %s37 = ssub.s32 8192, 8192
      %38 = vsyncadd [#allocation6], %s37
      %s39 = sshll.u32 [#allocation5], 4
      %s40 = int_to_ptr.vmem [resolvable:$true] %s39
      %45 = dma.hbm_to_vmem [thread:$0]  %s3, 8192, %s40, [#allocation6], 256, 256, 16
    $region17: #{conv_generator_forward.1} parent=1 // pred_fallthru
      _
    // Predicated region
    $region18: #{conv_generator_forward.1} parent=1 // pred_check
      _
    $region19: #{conv_generator_forward.1} parent=1 // pred_check_branch
      %47 = sbr.rel (0) target = $region21
    $region20: #{conv_generator_forward.1} parent=1 // pred_region
      _
    $region21: #{conv_generator_forward.1} parent=1 // pred_fallthru
      _
    // Predicated region
    $region22: #{conv_generator_forward.1} parent=1 // pred_check
      _
    $region23: #{conv_generator_forward.1} parent=1 // pred_check_branch
      %49 = sbr.rel (0) target = $region25
    $region24: #{conv_generator_forward.1} parent=1 // pred_region
      %s51 = ssub.s32 32768, 32768
      %52 = vsyncadd [#allocation6], %s51
      %s53 = sshll.u32 [#allocation7], 4
      %s54 = int_to_ptr.vmem [resolvable:$true] %s53
      %59 = dma.hbm_to_vmem [thread:$0]  %s5, 32768, %s54, [#allocation6], 512, 512, 32
    $region25: #{conv_generator_forward.1} parent=1 // pred_fallthru
      _
    // Predicated region
    $region26: #{conv_generator_forward.1} parent=1 // pred_check
      _
    $region27: #{conv_generator_forward.1} parent=1 // pred_check_branch
      %61 = sbr.rel (0) target = $region29
    $region28: #{conv_generator_forward.1} parent=1 // pred_region
      _
    $region29: #{conv_generator_forward.1} parent=1 // pred_fallthru
      _
    // Predicated region
    $region30: #{conv_generator_forward.1} parent=1 // pred_check
      _
    $region31: #{conv_generator_forward.1} parent=1 // pred_check_branch
      %63 = sbr.rel (0) target = $region33
    $region32: #{conv_generator_forward.1} parent=1 // pred_region
      %s65 = ssub.s32 8192, 8192
      %66 = vsyncadd [#allocation9], %s65
      %s67 = sshll.u32 [#allocation8], 4
      %s68 = int_to_ptr.vmem [resolvable:$true] %s67
      %73 = dma.hbm_to_vmem [thread:$0]  %s7, 8192, %s68, [#allocation9], 64, 64, 4
    $region33: #{conv_generator_forward.1} parent=1 // pred_fallthru
      _
    // Predicated region
    $region34: #{conv_generator_forward.1} parent=1 // pred_check
      _
    $region35: #{conv_generator_forward.1} parent=1 // pred_check_branch
      %75 = sbr.rel (0) target = $region37
    $region36: #{conv_generator_forward.1} parent=1 // pred_region
      _
    $region37: #{conv_generator_forward.1} parent=1 // pred_fallthru
      _
    // Predicated region
    $region38: #{conv_generator_forward.1} parent=1 // pred_check
      _
    $region39: #{conv_generator_forward.1} parent=1 // pred_check_branch
      %77 = sbr.rel (0) target = $region41
    $region40: #{conv_generator_forward.1} parent=1 // pred_region
      %78 = dma.done [#allocation3], 2048
    $region41: #{conv_generator_forward.1} parent=1 // pred_fallthru
      _
    // Predicated region
    $region42: #{conv_generator_forward.1} parent=1 // pred_check
      _
    $region43: #{conv_generator_forward.1} parent=1 // pred_check_branch
      %80 = sbr.rel (0) target = $region45
    $region44: #{conv_generator_forward.1} parent=1 // pred_region
      %81 = dma.done [#allocation6], 8192
    $region45: #{conv_generator_forward.1} parent=1 // pred_fallthru
      _
    // Predicated region
    $region46: #{conv_generator_forward.1} parent=1 // pred_check
      _
    $region47: #{conv_generator_forward.1} parent=1 // pred_check_branch
      %83 = sbr.rel (0) target = $region49
    $region48: #{conv_generator_forward.1} parent=1 // pred_region
      %84 = dma.done [#allocation6], 32768
    $region49: #{conv_generator_forward.1} parent=1 // pred_fallthru
      _
    // Predicated region
    $region50: #{conv_generator_forward.1} parent=1 // pred_check
      _
    $region51: #{conv_generator_forward.1} parent=1 // pred_check_branch
      %86 = sbr.rel (0) target = $region53
    $region52: #{conv_generator_forward.1} parent=1 // pred_region
      %87 = dma.done [#allocation9], 8192
    $region53: #{conv_generator_forward.1} parent=1 // pred_fallthru
      _
    %v89 = vld [vmem:[%s0] sm:$0xff]
    %v90 = vpack.c.bf16 %v89, %v89
    %v91 = vld [vmem:[#allocation2] sm:$0xff]
    %v92 = vld [vmem:[#allocation2 + $0x8] sm:$0xff]
    %v93 = vld [vmem:[#allocation2 + $0x10] sm:$0xff]
    %v94 = vld [vmem:[#allocation2 + $0x18] sm:$0xff]
    %v95 = vld [vmem:[#allocation2 + $0x20] sm:$0xff]
    %v96 = vld [vmem:[#allocation2 + $0x28] sm:$0xff]
    %v97 = vld [vmem:[#allocation2 + $0x30] sm:$0xff]
    %v98 = vld [vmem:[#allocation2 + $0x38] sm:$0xff]
    %v99 = vld [vmem:[#allocation2 + $0x40] sm:$0xff]
    %v100 = vld [vmem:[#allocation2 + $0x48] sm:$0xff]
    %v101 = vld [vmem:[#allocation2 + $0x50] sm:$0xff]
    %v102 = vld [vmem:[#allocation2 + $0x58] sm:$0xff]
    %v103 = vld [vmem:[#allocation2 + $0x60] sm:$0xff]
    %v104 = vld [vmem:[#allocation2 + $0x68] sm:$0xff]
    %v105 = vld [vmem:[#allocation2 + $0x70] sm:$0xff]
    %v106 = vld [vmem:[#allocation2 + $0x78] sm:$0xff]
    %v107 = vld [vmem:[%s2] sm:$0x3]
    %v109 = vlaneseq
    %v110 = vshrl.u32 %v109, 7
    %v111 = vsub.s32 0, %v110
    %v112 = vrot.slane %v107, %v111
    %v113 = vlaneseq
    %v114 = vshrl.u32 %v113, 7
    %v115 = vsub.s32 1, %v114
    %v116 = vrot.slane %v107, %v115
    %v135 = vunpack.c.l.b16 %v91
    %v136 = vunpack.c.h.b16 %v91
    %v137 = vunpack.c.l.b16 %v92
    %v138 = vunpack.c.h.b16 %v92
    %v139 = vunpack.c.l.b16 %v93
    %v140 = vunpack.c.h.b16 %v93
    %v141 = vunpack.c.l.b16 %v94
    %v142 = vunpack.c.h.b16 %v94
    %v143 = vunpack.c.l.b16 %v95
    %v144 = vunpack.c.h.b16 %v95
    %v145 = vunpack.c.l.b16 %v96
    %v146 = vunpack.c.h.b16 %v96
    %v147 = vunpack.c.l.b16 %v97
    %v148 = vunpack.c.h.b16 %v97
    %v149 = vunpack.c.l.b16 %v98
    %v150 = vunpack.c.h.b16 %v98
    %v151 = vunpack.c.l.b16 %v99
    %v152 = vunpack.c.h.b16 %v99
    %v153 = vunpack.c.l.b16 %v100
    %v154 = vunpack.c.h.b16 %v100
    %v155 = vunpack.c.l.b16 %v101
    %v156 = vunpack.c.h.b16 %v101
    %v157 = vunpack.c.l.b16 %v102
    %v158 = vunpack.c.h.b16 %v102
    %v159 = vunpack.c.l.b16 %v103
    %v160 = vunpack.c.h.b16 %v103
    %v161 = vunpack.c.l.b16 %v104
    %v162 = vunpack.c.h.b16 %v104
    %v163 = vunpack.c.l.b16 %v105
    %v164 = vunpack.c.h.b16 %v105
    %v165 = vunpack.c.l.b16 %v106
    %v166 = vunpack.c.h.b16 %v106
    %v167 = vpack.c.b16 %v137, %v135
    %v168 = vpack.c.b16 %v138, %v136
    %v169 = vpack.c.b16 %v141, %v139
    %v170 = vpack.c.b16 %v142, %v140
    %v171 = vpack.c.b16 %v145, %v143
    %v172 = vpack.c.b16 %v146, %v144
    %v173 = vpack.c.b16 %v149, %v147
    %v174 = vpack.c.b16 %v150, %v148
    %v175 = vpack.c.b16 %v153, %v151
    %v176 = vpack.c.b16 %v154, %v152
    %v177 = vpack.c.b16 %v157, %v155
    %v178 = vpack.c.b16 %v158, %v156
    %v179 = vpack.c.b16 %v161, %v159
    %v180 = vpack.c.b16 %v162, %v160
    %v181 = vpack.c.b16 %v165, %v163
    %v182 = vpack.c.b16 %v166, %v164
    %199 = vmatprep.subr.bf16.mxu0 %v168
    %200 = vmatpush1.bf16.msra.mxu0 %v167
    %201 = vmatprep.subr.bf16.mxu0 %v170
    %202 = vmatpush1.bf16.msra.mxu0 %v169
    %203 = vmatprep.subr.bf16.mxu0 %v172
    %204 = vmatpush1.bf16.msra.mxu0 %v171
    %205 = vmatprep.subr.bf16.mxu0 %v174
    %206 = vmatpush1.bf16.msra.mxu0 %v173
    %207 = vmatprep.subr.bf16.mxu0 %v176
    %208 = vmatpush1.bf16.msra.mxu0 %v175
    %209 = vmatprep.subr.bf16.mxu0 %v178
    %210 = vmatpush1.bf16.msra.mxu0 %v177
    %211 = vmatprep.subr.bf16.mxu0 %v180
    %212 = vmatpush1.bf16.msra.mxu0 %v179
    %213 = vmatprep.subr.bf16.mxu0 %v182
    %214 = vmatpush1.bf16.msra.mxu0 %v181
    %215 = vmatprep.subr.bf16.mxu0 0
    %216 = vmatpush1.bf16.msra.mxu0 0
    %217 = vmatprep.subr.bf16.mxu0 0
    %218 = vmatpush1.bf16.msra.mxu0 0
    %219 = vmatprep.subr.bf16.mxu0 0
    %220 = vmatpush1.bf16.msra.mxu0 0
    %221 = vmatprep.subr.bf16.mxu0 0
    %222 = vmatpush1.bf16.msra.mxu0 0
    %223 = vmatprep.subr.bf16.mxu0 0
    %224 = vmatpush1.bf16.msra.mxu0 0
    %225 = vmatprep.subr.bf16.mxu0 0
    %226 = vmatpush1.bf16.msra.mxu0 0
    %227 = vmatprep.subr.bf16.mxu0 0
    %228 = vmatpush1.bf16.msra.mxu0 0
    %229 = vmatprep.subr.bf16.mxu0 0
    %230 = vmatpush1.bf16.msra.mxu0 0
    %231 = vmatprep.mubr.bf16.mxu0 0
    %232 = vmatmul.mubr.bf16.gmra.mrb[0].mxu0 %v90
    %v233 = vpop.f32.mrb[0].mxu0
    %v234 = vadd.f32 %v112, %v233
    %v235 = vpop.f32.mrb[0].mxu0
    %v236 = vadd.f32 %v116, %v235
    %v237 = vpop.f32.mrb[0].mxu0
    %v238 = vpop.f32.mrb[0].mxu0
    %239 = vdwg.mxu0
    %v240 = vmax.f32 %v234, 0.0
    %v241 = vmax.f32 %v236, 0.0
    %v242 = vpack.c.bf16 %v240, %v240
    %v243 = vpack.c.bf16 %v241, %v241
    %v244 = vld [vmem:[#allocation5] sm:$0xff]
    %v245 = vld [vmem:[#allocation5 + $0x8] sm:$0xff]
    %v246 = vld [vmem:[#allocation5 + $0x10] sm:$0xff]
    %v247 = vld [vmem:[#allocation5 + $0x18] sm:$0xff]
    %v248 = vld [vmem:[#allocation5 + $0x20] sm:$0xff]
    %v249 = vld [vmem:[#allocation5 + $0x28] sm:$0xff]
    %v250 = vld [vmem:[#allocation5 + $0x30] sm:$0xff]
    %v251 = vld [vmem:[#allocation5 + $0x38] sm:$0xff]
    %v252 = vld [vmem:[#allocation5 + $0x40] sm:$0xff]
    %v253 = vld [vmem:[#allocation5 + $0x48] sm:$0xff]
    %v254 = vld [vmem:[#allocation5 + $0x50] sm:$0xff]
    %v255 = vld [vmem:[#allocation5 + $0x58] sm:$0xff]
    %v256 = vld [vmem:[#allocation5 + $0x60] sm:$0xff]
    %v257 = vld [vmem:[#allocation5 + $0x68] sm:$0xff]
    %v258 = vld [vmem:[#allocation5 + $0x70] sm:$0xff]
    %v259 = vld [vmem:[#allocation5 + $0x78] sm:$0xff]
    %v260 = vld [vmem:[#allocation5 + $0x80] sm:$0xff]
    %v261 = vld [vmem:[#allocation5 + $0x88] sm:$0xff]
    %v262 = vld [vmem:[#allocation5 + $0x90] sm:$0xff]
    %v263 = vld [vmem:[#allocation5 + $0x98] sm:$0xff]
    %v264 = vld [vmem:[#allocation5 + $0xa0] sm:$0xff]
    %v265 = vld [vmem:[#allocation5 + $0xa8] sm:$0xff]
    %v266 = vld [vmem:[#allocation5 + $0xb0] sm:$0xff]
    %v267 = vld [vmem:[#allocation5 + $0xb8] sm:$0xff]
    %v268 = vld [vmem:[#allocation5 + $0xc0] sm:$0xff]
    %v269 = vld [vmem:[#allocation5 + $0xc8] sm:$0xff]
    %v270 = vld [vmem:[#allocation5 + $0xd0] sm:$0xff]
    %v271 = vld [vmem:[#allocation5 + $0xd8] sm:$0xff]
    %v272 = vld [vmem:[#allocation5 + $0xe0] sm:$0xff]
    %v273 = vld [vmem:[#allocation5 + $0xe8] sm:$0xff]
    %v274 = vld [vmem:[#allocation5 + $0xf0] sm:$0xff]
    %v275 = vld [vmem:[#allocation5 + $0xf8] sm:$0xff]
    %v276 = vld [vmem:[#allocation5 + $0x100] sm:$0xff]
    %v277 = vld [vmem:[#allocation5 + $0x108] sm:$0xff]
    %v278 = vld [vmem:[#allocation5 + $0x110] sm:$0xff]
    %v279 = vld [vmem:[#allocation5 + $0x118] sm:$0xff]
    %v280 = vld [vmem:[#allocation5 + $0x120] sm:$0xff]
    %v281 = vld [vmem:[#allocation5 + $0x128] sm:$0xff]
    %v282 = vld [vmem:[#allocation5 + $0x130] sm:$0xff]
    %v283 = vld [vmem:[#allocation5 + $0x138] sm:$0xff]
    %v284 = vld [vmem:[#allocation5 + $0x140] sm:$0xff]
    %v285 = vld [vmem:[#allocation5 + $0x148] sm:$0xff]
    %v286 = vld [vmem:[#allocation5 + $0x150] sm:$0xff]
    %v287 = vld [vmem:[#allocation5 + $0x158] sm:$0xff]
    %v288 = vld [vmem:[#allocation5 + $0x160] sm:$0xff]
    %v289 = vld [vmem:[#allocation5 + $0x168] sm:$0xff]
    %v290 = vld [vmem:[#allocation5 + $0x170] sm:$0xff]
    %v291 = vld [vmem:[#allocation5 + $0x178] sm:$0xff]
    %v292 = vld [vmem:[#allocation5 + $0x180] sm:$0xff]
    %v293 = vld [vmem:[#allocation5 + $0x188] sm:$0xff]
    %v294 = vld [vmem:[#allocation5 + $0x190] sm:$0xff]
    %v295 = vld [vmem:[#allocation5 + $0x198] sm:$0xff]
    %v296 = vld [vmem:[#allocation5 + $0x1a0] sm:$0xff]
    %v297 = vld [vmem:[#allocation5 + $0x1a8] sm:$0xff]
    %v298 = vld [vmem:[#allocation5 + $0x1b0] sm:$0xff]
    %v299 = vld [vmem:[#allocation5 + $0x1b8] sm:$0xff]
    %v300 = vld [vmem:[#allocation5 + $0x1c0] sm:$0xff]
    %v301 = vld [vmem:[#allocation5 + $0x1c8] sm:$0xff]
    %v302 = vld [vmem:[#allocation5 + $0x1d0] sm:$0xff]
    %v303 = vld [vmem:[#allocation5 + $0x1d8] sm:$0xff]
    %v304 = vld [vmem:[#allocation5 + $0x1e0] sm:$0xff]
    %v305 = vld [vmem:[#allocation5 + $0x1e8] sm:$0xff]
    %v306 = vld [vmem:[#allocation5 + $0x1f0] sm:$0xff]
    %v307 = vld [vmem:[#allocation5 + $0x1f8] sm:$0xff]
    %v308 = vld [vmem:[%s4] sm:$0xf]
    %v310 = vlaneseq
    %v311 = vshrl.u32 %v310, 7
    %v312 = vsub.s32 0, %v311
    %v313 = vrot.slane %v308, %v312
    %v314 = vlaneseq
    %v315 = vshrl.u32 %v314, 7
    %v316 = vsub.s32 1, %v315
    %v317 = vrot.slane %v308, %v316
    %v318 = vlaneseq
    %v319 = vshrl.u32 %v318, 7
    %v320 = vsub.s32 2, %v319
    %v321 = vrot.slane %v308, %v320
    %v322 = vlaneseq
    %v323 = vshrl.u32 %v322, 7
    %v324 = vsub.s32 3, %v323
    %v325 = vrot.slane %v308, %v324
    %v394 = vunpack.c.l.b16 %v244
    %v395 = vunpack.c.h.b16 %v244
    %v396 = vunpack.c.l.b16 %v245
    %v397 = vunpack.c.h.b16 %v245
    %v398 = vunpack.c.l.b16 %v246
    %v399 = vunpack.c.h.b16 %v246
    %v400 = vunpack.c.l.b16 %v247
    %v401 = vunpack.c.h.b16 %v247
    %v402 = vunpack.c.l.b16 %v248
    %v403 = vunpack.c.h.b16 %v248
    %v404 = vunpack.c.l.b16 %v249
    %v405 = vunpack.c.h.b16 %v249
    %v406 = vunpack.c.l.b16 %v250
    %v407 = vunpack.c.h.b16 %v250
    %v408 = vunpack.c.l.b16 %v251
    %v409 = vunpack.c.h.b16 %v251
    %v410 = vunpack.c.l.b16 %v252
    %v411 = vunpack.c.h.b16 %v252
    %v412 = vunpack.c.l.b16 %v253
    %v413 = vunpack.c.h.b16 %v253
    %v414 = vunpack.c.l.b16 %v254
    %v415 = vunpack.c.h.b16 %v254
    %v416 = vunpack.c.l.b16 %v255
    %v417 = vunpack.c.h.b16 %v255
    %v418 = vunpack.c.l.b16 %v256
    %v419 = vunpack.c.h.b16 %v256
    %v420 = vunpack.c.l.b16 %v257
    %v421 = vunpack.c.h.b16 %v257
    %v422 = vunpack.c.l.b16 %v258
    %v423 = vunpack.c.h.b16 %v258
    %v424 = vunpack.c.l.b16 %v259
    %v425 = vunpack.c.h.b16 %v259
    %v426 = vunpack.c.l.b16 %v260
    %v427 = vunpack.c.h.b16 %v260
    %v428 = vunpack.c.l.b16 %v261
    %v429 = vunpack.c.h.b16 %v261
    %v430 = vunpack.c.l.b16 %v262
    %v431 = vunpack.c.h.b16 %v262
    %v432 = vunpack.c.l.b16 %v263
    %v433 = vunpack.c.h.b16 %v263
    %v434 = vunpack.c.l.b16 %v264
    %v435 = vunpack.c.h.b16 %v264
    %v436 = vunpack.c.l.b16 %v265
    %v437 = vunpack.c.h.b16 %v265
    %v438 = vunpack.c.l.b16 %v266
    %v439 = vunpack.c.h.b16 %v266
    %v440 = vunpack.c.l.b16 %v267
    %v441 = vunpack.c.h.b16 %v267
    %v442 = vunpack.c.l.b16 %v268
    %v443 = vunpack.c.h.b16 %v268
    %v444 = vunpack.c.l.b16 %v269
    %v445 = vunpack.c.h.b16 %v269
    %v446 = vunpack.c.l.b16 %v270
    %v447 = vunpack.c.h.b16 %v270
    %v448 = vunpack.c.l.b16 %v271
    %v449 = vunpack.c.h.b16 %v271
    %v450 = vunpack.c.l.b16 %v272
    %v451 = vunpack.c.h.b16 %v272
    %v452 = vunpack.c.l.b16 %v273
    %v453 = vunpack.c.h.b16 %v273
    %v454 = vunpack.c.l.b16 %v274
    %v455 = vunpack.c.h.b16 %v274
    %v456 = vunpack.c.l.b16 %v275
    %v457 = vunpack.c.h.b16 %v275
    %v458 = vunpack.c.l.b16 %v276
    %v459 = vunpack.c.h.b16 %v276
    %v460 = vunpack.c.l.b16 %v277
    %v461 = vunpack.c.h.b16 %v277
    %v462 = vunpack.c.l.b16 %v278
    %v463 = vunpack.c.h.b16 %v278
    %v464 = vunpack.c.l.b16 %v279
    %v465 = vunpack.c.h.b16 %v279
    %v466 = vunpack.c.l.b16 %v280
    %v467 = vunpack.c.h.b16 %v280
    %v468 = vunpack.c.l.b16 %v281
    %v469 = vunpack.c.h.b16 %v281
    %v470 = vunpack.c.l.b16 %v282
    %v471 = vunpack.c.h.b16 %v282
    %v472 = vunpack.c.l.b16 %v283
    %v473 = vunpack.c.h.b16 %v283
    %v474 = vunpack.c.l.b16 %v284
    %v475 = vunpack.c.h.b16 %v284
    %v476 = vunpack.c.l.b16 %v285
    %v477 = vunpack.c.h.b16 %v285
    %v478 = vunpack.c.l.b16 %v286
    %v479 = vunpack.c.h.b16 %v286
    %v480 = vunpack.c.l.b16 %v287
    %v481 = vunpack.c.h.b16 %v287
    %v482 = vunpack.c.l.b16 %v288
    %v483 = vunpack.c.h.b16 %v288
    %v484 = vunpack.c.l.b16 %v289
    %v485 = vunpack.c.h.b16 %v289
    %v486 = vunpack.c.l.b16 %v290
    %v487 = vunpack.c.h.b16 %v290
    %v488 = vunpack.c.l.b16 %v291
    %v489 = vunpack.c.h.b16 %v291
    %v490 = vunpack.c.l.b16 %v292
    %v491 = vunpack.c.h.b16 %v292
    %v492 = vunpack.c.l.b16 %v293
    %v493 = vunpack.c.h.b16 %v293
    %v494 = vunpack.c.l.b16 %v294
    %v495 = vunpack.c.h.b16 %v294
    %v496 = vunpack.c.l.b16 %v295
    %v497 = vunpack.c.h.b16 %v295
    %v498 = vunpack.c.l.b16 %v296
    %v499 = vunpack.c.h.b16 %v296
    %v500 = vunpack.c.l.b16 %v297
    %v501 = vunpack.c.h.b16 %v297
    %v502 = vunpack.c.l.b16 %v298
    %v503 = vunpack.c.h.b16 %v298
    %v504 = vunpack.c.l.b16 %v299
    %v505 = vunpack.c.h.b16 %v299
    %v506 = vunpack.c.l.b16 %v300
    %v507 = vunpack.c.h.b16 %v300
    %v508 = vunpack.c.l.b16 %v301
    %v509 = vunpack.c.h.b16 %v301
    %v510 = vunpack.c.l.b16 %v302
    %v511 = vunpack.c.h.b16 %v302
    %v512 = vunpack.c.l.b16 %v303
    %v513 = vunpack.c.h.b16 %v303
    %v514 = vunpack.c.l.b16 %v304
    %v515 = vunpack.c.h.b16 %v304
    %v516 = vunpack.c.l.b16 %v305
    %v517 = vunpack.c.h.b16 %v305
    %v518 = vunpack.c.l.b16 %v306
    %v519 = vunpack.c.h.b16 %v306
    %v520 = vunpack.c.l.b16 %v307
    %v521 = vunpack.c.h.b16 %v307
    %v522 = vpack.c.b16 %v398, %v394
    %v523 = vpack.c.b16 %v399, %v395
    %v524 = vpack.c.b16 %v400, %v396
    %v525 = vpack.c.b16 %v401, %v397
    %v526 = vpack.c.b16 %v406, %v402
    %v527 = vpack.c.b16 %v407, %v403
    %v528 = vpack.c.b16 %v408, %v404
    %v529 = vpack.c.b16 %v409, %v405
    %v530 = vpack.c.b16 %v414, %v410
    %v531 = vpack.c.b16 %v415, %v411
    %v532 = vpack.c.b16 %v416, %v412
    %v533 = vpack.c.b16 %v417, %v413
    %v534 = vpack.c.b16 %v422, %v418
    %v535 = vpack.c.b16 %v423, %v419
    %v536 = vpack.c.b16 %v424, %v420
    %v537 = vpack.c.b16 %v425, %v421
    %v538 = vpack.c.b16 %v430, %v426
    %v539 = vpack.c.b16 %v431, %v427
    %v540 = vpack.c.b16 %v432, %v428
    %v541 = vpack.c.b16 %v433, %v429
    %v542 = vpack.c.b16 %v438, %v434
    %v543 = vpack.c.b16 %v439, %v435
    %v544 = vpack.c.b16 %v440, %v436
    %v545 = vpack.c.b16 %v441, %v437
    %v546 = vpack.c.b16 %v446, %v442
    %v547 = vpack.c.b16 %v447, %v443
    %v548 = vpack.c.b16 %v448, %v444
    %v549 = vpack.c.b16 %v449, %v445
    %v550 = vpack.c.b16 %v454, %v450
    %v551 = vpack.c.b16 %v455, %v451
    %v552 = vpack.c.b16 %v456, %v452
    %v553 = vpack.c.b16 %v457, %v453
    %v554 = vpack.c.b16 %v462, %v458
    %v555 = vpack.c.b16 %v463, %v459
    %v556 = vpack.c.b16 %v464, %v460
    %v557 = vpack.c.b16 %v465, %v461
    %v558 = vpack.c.b16 %v470, %v466
    %v559 = vpack.c.b16 %v471, %v467
    %v560 = vpack.c.b16 %v472, %v468
    %v561 = vpack.c.b16 %v473, %v469
    %v562 = vpack.c.b16 %v478, %v474
    %v563 = vpack.c.b16 %v479, %v475
    %v564 = vpack.c.b16 %v480, %v476
    %v565 = vpack.c.b16 %v481, %v477
    %v566 = vpack.c.b16 %v486, %v482
    %v567 = vpack.c.b16 %v487, %v483
    %v568 = vpack.c.b16 %v488, %v484
    %v569 = vpack.c.b16 %v489, %v485
    %v570 = vpack.c.b16 %v494, %v490
    %v571 = vpack.c.b16 %v495, %v491
    %v572 = vpack.c.b16 %v496, %v492
    %v573 = vpack.c.b16 %v497, %v493
    %v574 = vpack.c.b16 %v502, %v498
    %v575 = vpack.c.b16 %v503, %v499
    %v576 = vpack.c.b16 %v504, %v500
    %v577 = vpack.c.b16 %v505, %v501
    %v578 = vpack.c.b16 %v510, %v506
    %v579 = vpack.c.b16 %v511, %v507
    %v580 = vpack.c.b16 %v512, %v508
    %v581 = vpack.c.b16 %v513, %v509
    %v582 = vpack.c.b16 %v518, %v514
    %v583 = vpack.c.b16 %v519, %v515
    %v584 = vpack.c.b16 %v520, %v516
    %v585 = vpack.c.b16 %v521, %v517
    %650 = vmatprep.subr.bf16.mxu0 %v523
    %651 = vmatpush1.bf16.msra.mxu0 %v522
    %652 = vmatprep.subr.bf16.mxu0 %v527
    %653 = vmatpush1.bf16.msra.mxu0 %v526
    %654 = vmatprep.subr.bf16.mxu0 %v531
    %655 = vmatpush1.bf16.msra.mxu0 %v530
    %656 = vmatprep.subr.bf16.mxu0 %v535
    %657 = vmatpush1.bf16.msra.mxu0 %v534
    %658 = vmatprep.subr.bf16.mxu0 %v539
    %659 = vmatpush1.bf16.msra.mxu0 %v538
    %660 = vmatprep.subr.bf16.mxu0 %v543
    %661 = vmatpush1.bf16.msra.mxu0 %v542
    %662 = vmatprep.subr.bf16.mxu0 %v547
    %663 = vmatpush1.bf16.msra.mxu0 %v546
    %664 = vmatprep.subr.bf16.mxu0 %v551
    %665 = vmatpush1.bf16.msra.mxu0 %v550
    %666 = vmatprep.subr.bf16.mxu0 %v555
    %667 = vmatpush1.bf16.msra.mxu0 %v554
    %668 = vmatprep.subr.bf16.mxu0 %v559
    %669 = vmatpush1.bf16.msra.mxu0 %v558
    %670 = vmatprep.subr.bf16.mxu0 %v563
    %671 = vmatpush1.bf16.msra.mxu0 %v562
    %672 = vmatprep.subr.bf16.mxu0 %v567
    %673 = vmatpush1.bf16.msra.mxu0 %v566
    %674 = vmatprep.subr.bf16.mxu0 %v571
    %675 = vmatpush1.bf16.msra.mxu0 %v570
    %676 = vmatprep.subr.bf16.mxu0 %v575
    %677 = vmatpush1.bf16.msra.mxu0 %v574
    %678 = vmatprep.subr.bf16.mxu0 %v579
    %679 = vmatpush1.bf16.msra.mxu0 %v578
    %680 = vmatprep.subr.bf16.mxu0 %v583
    %681 = vmatpush1.bf16.msra.mxu0 %v582
    %682 = vmatprep.mubr.bf16.mxu0 %v243
    %683 = vmatmul.mubr.bf16.gmra.mrb[0].mxu0 %v242
    %v684 = vpop.f32.mrb[0].mxu0
    %v685 = vadd.f32 %v313, %v684
    %v686 = vpop.f32.mrb[0].mxu0
    %v687 = vadd.f32 %v317, %v686
    %v688 = vpop.f32.mrb[0].mxu0
    %v689 = vpop.f32.mrb[0].mxu0
    %690 = vdwg.mxu0
    %691 = vmatprep.subr.bf16.mxu0 %v525
    %692 = vmatpush1.bf16.msra.mxu0 %v524
    %693 = vmatprep.subr.bf16.mxu0 %v529
    %694 = vmatpush1.bf16.msra.mxu0 %v528
    %695 = vmatprep.subr.bf16.mxu0 %v533
    %696 = vmatpush1.bf16.msra.mxu0 %v532
    %697 = vmatprep.subr.bf16.mxu0 %v537
    %698 = vmatpush1.bf16.msra.mxu0 %v536
    %699 = vmatprep.subr.bf16.mxu0 %v541
    %700 = vmatpush1.bf16.msra.mxu0 %v540
    %701 = vmatprep.subr.bf16.mxu0 %v545
    %702 = vmatpush1.bf16.msra.mxu0 %v544
    %703 = vmatprep.subr.bf16.mxu0 %v549
    %704 = vmatpush1.bf16.msra.mxu0 %v548
    %705 = vmatprep.subr.bf16.mxu0 %v553
    %706 = vmatpush1.bf16.msra.mxu0 %v552
    %707 = vmatprep.subr.bf16.mxu0 %v557
    %708 = vmatpush1.bf16.msra.mxu0 %v556
    %709 = vmatprep.subr.bf16.mxu0 %v561
    %710 = vmatpush1.bf16.msra.mxu0 %v560
    %711 = vmatprep.subr.bf16.mxu0 %v565
    %712 = vmatpush1.bf16.msra.mxu0 %v564
    %713 = vmatprep.subr.bf16.mxu0 %v569
    %714 = vmatpush1.bf16.msra.mxu0 %v568
    %715 = vmatprep.subr.bf16.mxu0 %v573
    %716 = vmatpush1.bf16.msra.mxu0 %v572
    %717 = vmatprep.subr.bf16.mxu0 %v577
    %718 = vmatpush1.bf16.msra.mxu0 %v576
    %719 = vmatprep.subr.bf16.mxu0 %v581
    %720 = vmatpush1.bf16.msra.mxu0 %v580
    %721 = vmatprep.subr.bf16.mxu0 %v585
    %722 = vmatpush1.bf16.msra.mxu0 %v584
    %723 = vmatprep.mubr.bf16.mxu0 %v243
    %724 = vmatmul.mubr.bf16.gmra.mrb[0].mxu0 %v242
    %v725 = vpop.f32.mrb[0].mxu0
    %v726 = vadd.f32 %v321, %v725
    %v727 = vpop.f32.mrb[0].mxu0
    %v728 = vadd.f32 %v325, %v727
    %v729 = vpop.f32.mrb[0].mxu0
    %v730 = vpop.f32.mrb[0].mxu0
    %731 = vdwg.mxu0
    %v732 = vmax.f32 %v685, 0.0
    %v733 = vmax.f32 %v687, 0.0
    %v734 = vmax.f32 %v726, 0.0
    %v735 = vmax.f32 %v728, 0.0
    %v736 = vpack.c.bf16 %v732, %v732
    %v737 = vpack.c.bf16 %v733, %v733
    %v738 = vpack.c.bf16 %v734, %v734
    %v739 = vpack.c.bf16 %v735, %v735
    %v740 = vld [vmem:[#allocation7] sm:$0xff]
    %v741 = vld [vmem:[#allocation7 + $0x8] sm:$0xff]
    %v742 = vld [vmem:[#allocation7 + $0x10] sm:$0xff]
    %v743 = vld [vmem:[#allocation7 + $0x18] sm:$0xff]
    %v744 = vld [vmem:[#allocation7 + $0x20] sm:$0xff]
    %v745 = vld [vmem:[#allocation7 + $0x28] sm:$0xff]
    %v746 = vld [vmem:[#allocation7 + $0x30] sm:$0xff]
    %v747 = vld [vmem:[#allocation7 + $0x38] sm:$0xff]
    %v748 = vld [vmem:[#allocation7 + $0x40] sm:$0xff]
    %v749 = vld [vmem:[#allocation7 + $0x48] sm:$0xff]
    %v750 = vld [vmem:[#allocation7 + $0x50] sm:$0xff]
    %v751 = vld [vmem:[#allocation7 + $0x58] sm:$0xff]
    %v752 = vld [vmem:[#allocation7 + $0x60] sm:$0xff]
    %v753 = vld [vmem:[#allocation7 + $0x68] sm:$0xff]
    %v754 = vld [vmem:[#allocation7 + $0x70] sm:$0xff]
    %v755 = vld [vmem:[#allocation7 + $0x78] sm:$0xff]
    %v756 = vld [vmem:[#allocation7 + $0x80] sm:$0xff]
    %v757 = vld [vmem:[#allocation7 + $0x88] sm:$0xff]
    %v758 = vld [vmem:[#allocation7 + $0x90] sm:$0xff]
    %v759 = vld [vmem:[#allocation7 + $0x98] sm:$0xff]
    %v760 = vld [vmem:[#allocation7 + $0xa0] sm:$0xff]
    %v761 = vld [vmem:[#allocation7 + $0xa8] sm:$0xff]
    %v762 = vld [vmem:[#allocation7 + $0xb0] sm:$0xff]
    %v763 = vld [vmem:[#allocation7 + $0xb8] sm:$0xff]
    %v764 = vld [vmem:[#allocation7 + $0xc0] sm:$0xff]
    %v765 = vld [vmem:[#allocation7 + $0xc8] sm:$0xff]
    %v766 = vld [vmem:[#allocation7 + $0xd0] sm:$0xff]
    %v767 = vld [vmem:[#allocation7 + $0xd8] sm:$0xff]
    %v768 = vld [vmem:[#allocation7 + $0xe0] sm:$0xff]
    %v769 = vld [vmem:[#allocation7 + $0xe8] sm:$0xff]
    %v770 = vld [vmem:[#allocation7 + $0xf0] sm:$0xff]
    %v771 = vld [vmem:[#allocation7 + $0xf8] sm:$0xff]
    %v772 = vld [vmem:[#allocation7 + $0x100] sm:$0xff]
    %v773 = vld [vmem:[#allocation7 + $0x108] sm:$0xff]
    %v774 = vld [vmem:[#allocation7 + $0x110] sm:$0xff]
    %v775 = vld [vmem:[#allocation7 + $0x118] sm:$0xff]
    %v776 = vld [vmem:[#allocation7 + $0x120] sm:$0xff]
    %v777 = vld [vmem:[#allocation7 + $0x128] sm:$0xff]
    %v778 = vld [vmem:[#allocation7 + $0x130] sm:$0xff]
    %v779 = vld [vmem:[#allocation7 + $0x138] sm:$0xff]
    %v780 = vld [vmem:[#allocation7 + $0x140] sm:$0xff]
    %v781 = vld [vmem:[#allocation7 + $0x148] sm:$0xff]
    %v782 = vld [vmem:[#allocation7 + $0x150] sm:$0xff]
    %v783 = vld [vmem:[#allocation7 + $0x158] sm:$0xff]
    %v784 = vld [vmem:[#allocation7 + $0x160] sm:$0xff]
    %v785 = vld [vmem:[#allocation7 + $0x168] sm:$0xff]
    %v786 = vld [vmem:[#allocation7 + $0x170] sm:$0xff]
    %v787 = vld [vmem:[#allocation7 + $0x178] sm:$0xff]
    %v788 = vld [vmem:[#allocation7 + $0x180] sm:$0xff]
    %v789 = vld [vmem:[#allocation7 + $0x188] sm:$0xff]
    %v790 = vld [vmem:[#allocation7 + $0x190] sm:$0xff]
    %v791 = vld [vmem:[#allocation7 + $0x198] sm:$0xff]
    %v792 = vld [vmem:[#allocation7 + $0x1a0] sm:$0xff]
    %v793 = vld [vmem:[#allocation7 + $0x1a8] sm:$0xff]
    %v794 = vld [vmem:[#allocation7 + $0x1b0] sm:$0xff]
    %v795 = vld [vmem:[#allocation7 + $0x1b8] sm:$0xff]
    %v796 = vld [vmem:[#allocation7 + $0x1c0] sm:$0xff]
    %v797 = vld [vmem:[#allocation7 + $0x1c8] sm:$0xff]
    %v798 = vld [vmem:[#allocation7 + $0x1d0] sm:$0xff]
    %v799 = vld [vmem:[#allocation7 + $0x1d8] sm:$0xff]
    %v800 = vld [vmem:[#allocation7 + $0x1e0] sm:$0xff]
    %v801 = vld [vmem:[#allocation7 + $0x1e8] sm:$0xff]
    %v802 = vld [vmem:[#allocation7 + $0x1f0] sm:$0xff]
    %v803 = vld [vmem:[#allocation7 + $0x1f8] sm:$0xff]
    %v804 = vld [vmem:[#allocation7 + $0x200] sm:$0xff]
    %v805 = vld [vmem:[#allocation7 + $0x208] sm:$0xff]
    %v806 = vld [vmem:[#allocation7 + $0x210] sm:$0xff]
    %v807 = vld [vmem:[#allocation7 + $0x218] sm:$0xff]
    %v808 = vld [vmem:[#allocation7 + $0x220] sm:$0xff]
    %v809 = vld [vmem:[#allocation7 + $0x228] sm:$0xff]
    %v810 = vld [vmem:[#allocation7 + $0x230] sm:$0xff]
    %v811 = vld [vmem:[#allocation7 + $0x238] sm:$0xff]
    %v812 = vld [vmem:[#allocation7 + $0x240] sm:$0xff]
    %v813 = vld [vmem:[#allocation7 + $0x248] sm:$0xff]
    %v814 = vld [vmem:[#allocation7 + $0x250] sm:$0xff]
    %v815 = vld [vmem:[#allocation7 + $0x258] sm:$0xff]
    %v816 = vld [vmem:[#allocation7 + $0x260] sm:$0xff]
    %v817 = vld [vmem:[#allocation7 + $0x268] sm:$0xff]
    %v818 = vld [vmem:[#allocation7 + $0x270] sm:$0xff]
    %v819 = vld [vmem:[#allocation7 + $0x278] sm:$0xff]
    %v820 = vld [vmem:[#allocation7 + $0x280] sm:$0xff]
    %v821 = vld [vmem:[#allocation7 + $0x288] sm:$0xff]
    %v822 = vld [vmem:[#allocation7 + $0x290] sm:$0xff]
    %v823 = vld [vmem:[#allocation7 + $0x298] sm:$0xff]
    %v824 = vld [vmem:[#allocation7 + $0x2a0] sm:$0xff]
    %v825 = vld [vmem:[#allocation7 + $0x2a8] sm:$0xff]
    %v826 = vld [vmem:[#allocation7 + $0x2b0] sm:$0xff]
    %v827 = vld [vmem:[#allocation7 + $0x2b8] sm:$0xff]
    %v828 = vld [vmem:[#allocation7 + $0x2c0] sm:$0xff]
    %v829 = vld [vmem:[#allocation7 + $0x2c8] sm:$0xff]
    %v830 = vld [vmem:[#allocation7 + $0x2d0] sm:$0xff]
    %v831 = vld [vmem:[#allocation7 + $0x2d8] sm:$0xff]
    %v832 = vld [vmem:[#allocation7 + $0x2e0] sm:$0xff]
    %v833 = vld [vmem:[#allocation7 + $0x2e8] sm:$0xff]
    %v834 = vld [vmem:[#allocation7 + $0x2f0] sm:$0xff]
    %v835 = vld [vmem:[#allocation7 + $0x2f8] sm:$0xff]
    %v836 = vld [vmem:[#allocation7 + $0x300] sm:$0xff]
    %v837 = vld [vmem:[#allocation7 + $0x308] sm:$0xff]
    %v838 = vld [vmem:[#allocation7 + $0x310] sm:$0xff]
    %v839 = vld [vmem:[#allocation7 + $0x318] sm:$0xff]
    %v840 = vld [vmem:[#allocation7 + $0x320] sm:$0xff]
    %v841 = vld [vmem:[#allocation7 + $0x328] sm:$0xff]
    %v842 = vld [vmem:[#allocation7 + $0x330] sm:$0xff]
    %v843 = vld [vmem:[#allocation7 + $0x338] sm:$0xff]
    %v844 = vld [vmem:[#allocation7 + $0x340] sm:$0xff]
    %v845 = vld [vmem:[#allocation7 + $0x348] sm:$0xff]
    %v846 = vld [vmem:[#allocation7 + $0x350] sm:$0xff]
    %v847 = vld [vmem:[#allocation7 + $0x358] sm:$0xff]
    %v848 = vld [vmem:[#allocation7 + $0x360] sm:$0xff]
    %v849 = vld [vmem:[#allocation7 + $0x368] sm:$0xff]
    %v850 = vld [vmem:[#allocation7 + $0x370] sm:$0xff]
    %v851 = vld [vmem:[#allocation7 + $0x378] sm:$0xff]
    %v852 = vld [vmem:[#allocation7 + $0x380] sm:$0xff]
    %v853 = vld [vmem:[#allocation7 + $0x388] sm:$0xff]
    %v854 = vld [vmem:[#allocation7 + $0x390] sm:$0xff]
    %v855 = vld [vmem:[#allocation7 + $0x398] sm:$0xff]
    %v856 = vld [vmem:[#allocation7 + $0x3a0] sm:$0xff]
    %v857 = vld [vmem:[#allocation7 + $0x3a8] sm:$0xff]
    %v858 = vld [vmem:[#allocation7 + $0x3b0] sm:$0xff]
    %v859 = vld [vmem:[#allocation7 + $0x3b8] sm:$0xff]
    %v860 = vld [vmem:[#allocation7 + $0x3c0] sm:$0xff]
    %v861 = vld [vmem:[#allocation7 + $0x3c8] sm:$0xff]
    %v862 = vld [vmem:[#allocation7 + $0x3d0] sm:$0xff]
    %v863 = vld [vmem:[#allocation7 + $0x3d8] sm:$0xff]
    %v864 = vld [vmem:[#allocation7 + $0x3e0] sm:$0xff]
    %v865 = vld [vmem:[#allocation7 + $0x3e8] sm:$0xff]
    %v866 = vld [vmem:[#allocation7 + $0x3f0] sm:$0xff]
    %v867 = vld [vmem:[#allocation7 + $0x3f8] sm:$0xff]
    %v868 = vld [vmem:[#allocation7 + $0x400] sm:$0xff]
    %v869 = vld [vmem:[#allocation7 + $0x408] sm:$0xff]
    %v870 = vld [vmem:[#allocation7 + $0x410] sm:$0xff]
    %v871 = vld [vmem:[#allocation7 + $0x418] sm:$0xff]
    %v872 = vld [vmem:[#allocation7 + $0x420] sm:$0xff]
    %v873 = vld [vmem:[#allocation7 + $0x428] sm:$0xff]
    %v874 = vld [vmem:[#allocation7 + $0x430] sm:$0xff]
    %v875 = vld [vmem:[#allocation7 + $0x438] sm:$0xff]
    %v876 = vld [vmem:[#allocation7 + $0x440] sm:$0xff]
    %v877 = vld [vmem:[#allocation7 + $0x448] sm:$0xff]
    %v878 = vld [vmem:[#allocation7 + $0x450] sm:$0xff]
    %v879 = vld [vmem:[#allocation7 + $0x458] sm:$0xff]
    %v880 = vld [vmem:[#allocation7 + $0x460] sm:$0xff]
    %v881 = vld [vmem:[#allocation7 + $0x468] sm:$0xff]
    %v882 = vld [vmem:[#allocation7 + $0x470] sm:$0xff]
    %v883 = vld [vmem:[#allocation7 + $0x478] sm:$0xff]
    %v884 = vld [vmem:[#allocation7 + $0x480] sm:$0xff]
    %v885 = vld [vmem:[#allocation7 + $0x488] sm:$0xff]
    %v886 = vld [vmem:[#allocation7 + $0x490] sm:$0xff]
    %v887 = vld [vmem:[#allocation7 + $0x498] sm:$0xff]
    %v888 = vld [vmem:[#allocation7 + $0x4a0] sm:$0xff]
    %v889 = vld [vmem:[#allocation7 + $0x4a8] sm:$0xff]
    %v890 = vld [vmem:[#allocation7 + $0x4b0] sm:$0xff]
    %v891 = vld [vmem:[#allocation7 + $0x4b8] sm:$0xff]
    %v892 = vld [vmem:[#allocation7 + $0x4c0] sm:$0xff]
    %v893 = vld [vmem:[#allocation7 + $0x4c8] sm:$0xff]
    %v894 = vld [vmem:[#allocation7 + $0x4d0] sm:$0xff]
    %v895 = vld [vmem:[#allocation7 + $0x4d8] sm:$0xff]
    %v896 = vld [vmem:[#allocation7 + $0x4e0] sm:$0xff]
    %v897 = vld [vmem:[#allocation7 + $0x4e8] sm:$0xff]
    %v898 = vld [vmem:[#allocation7 + $0x4f0] sm:$0xff]
    %v899 = vld [vmem:[#allocation7 + $0x4f8] sm:$0xff]
    %v900 = vld [vmem:[#allocation7 + $0x500] sm:$0xff]
    %v901 = vld [vmem:[#allocation7 + $0x508] sm:$0xff]
    %v902 = vld [vmem:[#allocation7 + $0x510] sm:$0xff]
    %v903 = vld [vmem:[#allocation7 + $0x518] sm:$0xff]
    %v904 = vld [vmem:[#allocation7 + $0x520] sm:$0xff]
    %v905 = vld [vmem:[#allocation7 + $0x528] sm:$0xff]
    %v906 = vld [vmem:[#allocation7 + $0x530] sm:$0xff]
    %v907 = vld [vmem:[#allocation7 + $0x538] sm:$0xff]
    %v908 = vld [vmem:[#allocation7 + $0x540] sm:$0xff]
    %v909 = vld [vmem:[#allocation7 + $0x548] sm:$0xff]
    %v910 = vld [vmem:[#allocation7 + $0x550] sm:$0xff]
    %v911 = vld [vmem:[#allocation7 + $0x558] sm:$0xff]
    %v912 = vld [vmem:[#allocation7 + $0x560] sm:$0xff]
    %v913 = vld [vmem:[#allocation7 + $0x568] sm:$0xff]
    %v914 = vld [vmem:[#allocation7 + $0x570] sm:$0xff]
    %v915 = vld [vmem:[#allocation7 + $0x578] sm:$0xff]
    %v916 = vld [vmem:[#allocation7 + $0x580] sm:$0xff]
    %v917 = vld [vmem:[#allocation7 + $0x588] sm:$0xff]
    %v918 = vld [vmem:[#allocation7 + $0x590] sm:$0xff]
    %v919 = vld [vmem:[#allocation7 + $0x598] sm:$0xff]
    %v920 = vld [vmem:[#allocation7 + $0x5a0] sm:$0xff]
    %v921 = vld [vmem:[#allocation7 + $0x5a8] sm:$0xff]
    %v922 = vld [vmem:[#allocation7 + $0x5b0] sm:$0xff]
    %v923 = vld [vmem:[#allocation7 + $0x5b8] sm:$0xff]
    %v924 = vld [vmem:[#allocation7 + $0x5c0] sm:$0xff]
    %v925 = vld [vmem:[#allocation7 + $0x5c8] sm:$0xff]
    %v926 = vld [vmem:[#allocation7 + $0x5d0] sm:$0xff]
    %v927 = vld [vmem:[#allocation7 + $0x5d8] sm:$0xff]
    %v928 = vld [vmem:[#allocation7 + $0x5e0] sm:$0xff]
    %v929 = vld [vmem:[#allocation7 + $0x5e8] sm:$0xff]
    %v930 = vld [vmem:[#allocation7 + $0x5f0] sm:$0xff]
    %v931 = vld [vmem:[#allocation7 + $0x5f8] sm:$0xff]
    %v932 = vld [vmem:[#allocation7 + $0x600] sm:$0xff]
    %v933 = vld [vmem:[#allocation7 + $0x608] sm:$0xff]
    %v934 = vld [vmem:[#allocation7 + $0x610] sm:$0xff]
    %v935 = vld [vmem:[#allocation7 + $0x618] sm:$0xff]
    %v936 = vld [vmem:[#allocation7 + $0x620] sm:$0xff]
    %v937 = vld [vmem:[#allocation7 + $0x628] sm:$0xff]
    %v938 = vld [vmem:[#allocation7 + $0x630] sm:$0xff]
    %v939 = vld [vmem:[#allocation7 + $0x638] sm:$0xff]
    %v940 = vld [vmem:[#allocation7 + $0x640] sm:$0xff]
    %v941 = vld [vmem:[#allocation7 + $0x648] sm:$0xff]
    %v942 = vld [vmem:[#allocation7 + $0x650] sm:$0xff]
    %v943 = vld [vmem:[#allocation7 + $0x658] sm:$0xff]
    %v944 = vld [vmem:[#allocation7 + $0x660] sm:$0xff]
    %v945 = vld [vmem:[#allocation7 + $0x668] sm:$0xff]
    %v946 = vld [vmem:[#allocation7 + $0x670] sm:$0xff]
    %v947 = vld [vmem:[#allocation7 + $0x678] sm:$0xff]
    %v948 = vld [vmem:[#allocation7 + $0x680] sm:$0xff]
    %v949 = vld [vmem:[#allocation7 + $0x688] sm:$0xff]
    %v950 = vld [vmem:[#allocation7 + $0x690] sm:$0xff]
    %v951 = vld [vmem:[#allocation7 + $0x698] sm:$0xff]
    %v952 = vld [vmem:[#allocation7 + $0x6a0] sm:$0xff]
    %v953 = vld [vmem:[#allocation7 + $0x6a8] sm:$0xff]
    %v954 = vld [vmem:[#allocation7 + $0x6b0] sm:$0xff]
    %v955 = vld [vmem:[#allocation7 + $0x6b8] sm:$0xff]
    %v956 = vld [vmem:[#allocation7 + $0x6c0] sm:$0xff]
    %v957 = vld [vmem:[#allocation7 + $0x6c8] sm:$0xff]
    %v958 = vld [vmem:[#allocation7 + $0x6d0] sm:$0xff]
    %v959 = vld [vmem:[#allocation7 + $0x6d8] sm:$0xff]
    %v960 = vld [vmem:[#allocation7 + $0x6e0] sm:$0xff]
    %v961 = vld [vmem:[#allocation7 + $0x6e8] sm:$0xff]
    %v962 = vld [vmem:[#allocation7 + $0x6f0] sm:$0xff]
    %v963 = vld [vmem:[#allocation7 + $0x6f8] sm:$0xff]
    %v964 = vld [vmem:[#allocation7 + $0x700] sm:$0xff]
    %v965 = vld [vmem:[#allocation7 + $0x708] sm:$0xff]
    %v966 = vld [vmem:[#allocation7 + $0x710] sm:$0xff]
    %v967 = vld [vmem:[#allocation7 + $0x718] sm:$0xff]
    %v968 = vld [vmem:[#allocation7 + $0x720] sm:$0xff]
    %v969 = vld [vmem:[#allocation7 + $0x728] sm:$0xff]
    %v970 = vld [vmem:[#allocation7 + $0x730] sm:$0xff]
    %v971 = vld [vmem:[#allocation7 + $0x738] sm:$0xff]
    %v972 = vld [vmem:[#allocation7 + $0x740] sm:$0xff]
    %v973 = vld [vmem:[#allocation7 + $0x748] sm:$0xff]
    %v974 = vld [vmem:[#allocation7 + $0x750] sm:$0xff]
    %v975 = vld [vmem:[#allocation7 + $0x758] sm:$0xff]
    %v976 = vld [vmem:[#allocation7 + $0x760] sm:$0xff]
    %v977 = vld [vmem:[#allocation7 + $0x768] sm:$0xff]
    %v978 = vld [vmem:[#allocation7 + $0x770] sm:$0xff]
    %v979 = vld [vmem:[#allocation7 + $0x778] sm:$0xff]
    %v980 = vld [vmem:[#allocation7 + $0x780] sm:$0xff]
    %v981 = vld [vmem:[#allocation7 + $0x788] sm:$0xff]
    %v982 = vld [vmem:[#allocation7 + $0x790] sm:$0xff]
    %v983 = vld [vmem:[#allocation7 + $0x798] sm:$0xff]
    %v984 = vld [vmem:[#allocation7 + $0x7a0] sm:$0xff]
    %v985 = vld [vmem:[#allocation7 + $0x7a8] sm:$0xff]
    %v986 = vld [vmem:[#allocation7 + $0x7b0] sm:$0xff]
    %v987 = vld [vmem:[#allocation7 + $0x7b8] sm:$0xff]
    %v988 = vld [vmem:[#allocation7 + $0x7c0] sm:$0xff]
    %v989 = vld [vmem:[#allocation7 + $0x7c8] sm:$0xff]
    %v990 = vld [vmem:[#allocation7 + $0x7d0] sm:$0xff]
    %v991 = vld [vmem:[#allocation7 + $0x7d8] sm:$0xff]
    %v992 = vld [vmem:[#allocation7 + $0x7e0] sm:$0xff]
    %v993 = vld [vmem:[#allocation7 + $0x7e8] sm:$0xff]
    %v994 = vld [vmem:[#allocation7 + $0x7f0] sm:$0xff]
    %v995 = vld [vmem:[#allocation7 + $0x7f8] sm:$0xff]
    %v996 = vld [vmem:[%s6] sm:$0xff]
    %v998 = vlaneseq
    %v999 = vshrl.u32 %v998, 7
    %v1000 = vsub.s32 0, %v999
    %v1001 = vrot.slane %v996, %v1000
    %v1002 = vlaneseq
    %v1003 = vshrl.u32 %v1002, 7
    %v1004 = vsub.s32 1, %v1003
    %v1005 = vrot.slane %v996, %v1004
    %v1006 = vlaneseq
    %v1007 = vshrl.u32 %v1006, 7
    %v1008 = vsub.s32 2, %v1007
    %v1009 = vrot.slane %v996, %v1008
    %v1010 = vlaneseq
    %v1011 = vshrl.u32 %v1010, 7
    %v1012 = vsub.s32 3, %v1011
    %v1013 = vrot.slane %v996, %v1012
    %v1014 = vlaneseq
    %v1015 = vshrl.u32 %v1014, 7
    %v1016 = vsub.s32 4, %v1015
    %v1017 = vrot.slane %v996, %v1016
    %v1018 = vlaneseq
    %v1019 = vshrl.u32 %v1018, 7
    %v1020 = vsub.s32 5, %v1019
    %v1021 = vrot.slane %v996, %v1020
    %v1022 = vlaneseq
    %v1023 = vshrl.u32 %v1022, 7
    %v1024 = vsub.s32 6, %v1023
    %v1025 = vrot.slane %v996, %v1024
    %v1026 = vlaneseq
    %v1027 = vshrl.u32 %v1026, 7
    %v1028 = vsub.s32 7, %v1027
    %v1029 = vrot.slane %v996, %v1028
    %v1294 = vunpack.c.l.b16 %v740
    %v1295 = vunpack.c.h.b16 %v740
    %v1296 = vunpack.c.l.b16 %v741
    %v1297 = vunpack.c.h.b16 %v741
    %v1298 = vunpack.c.l.b16 %v742
    %v1299 = vunpack.c.h.b16 %v742
    %v1300 = vunpack.c.l.b16 %v743
    %v1301 = vunpack.c.h.b16 %v743
    %v1302 = vunpack.c.l.b16 %v744
    %v1303 = vunpack.c.h.b16 %v744
    %v1304 = vunpack.c.l.b16 %v745
    %v1305 = vunpack.c.h.b16 %v745
    %v1306 = vunpack.c.l.b16 %v746
    %v1307 = vunpack.c.h.b16 %v746
    %v1308 = vunpack.c.l.b16 %v747
    %v1309 = vunpack.c.h.b16 %v747
    %v1310 = vunpack.c.l.b16 %v748
    %v1311 = vunpack.c.h.b16 %v748
    %v1312 = vunpack.c.l.b16 %v749
    %v1313 = vunpack.c.h.b16 %v749
    %v1314 = vunpack.c.l.b16 %v750
    %v1315 = vunpack.c.h.b16 %v750
    %v1316 = vunpack.c.l.b16 %v751
    %v1317 = vunpack.c.h.b16 %v751
    %v1318 = vunpack.c.l.b16 %v752
    %v1319 = vunpack.c.h.b16 %v752
    %v1320 = vunpack.c.l.b16 %v753
    %v1321 = vunpack.c.h.b16 %v753
    %v1322 = vunpack.c.l.b16 %v754
    %v1323 = vunpack.c.h.b16 %v754
    %v1324 = vunpack.c.l.b16 %v755
    %v1325 = vunpack.c.h.b16 %v755
    %v1326 = vunpack.c.l.b16 %v756
    %v1327 = vunpack.c.h.b16 %v756
    %v1328 = vunpack.c.l.b16 %v757
    %v1329 = vunpack.c.h.b16 %v757
    %v1330 = vunpack.c.l.b16 %v758
    %v1331 = vunpack.c.h.b16 %v758
    %v1332 = vunpack.c.l.b16 %v759
    %v1333 = vunpack.c.h.b16 %v759
    %v1334 = vunpack.c.l.b16 %v760
    %v1335 = vunpack.c.h.b16 %v760
    %v1336 = vunpack.c.l.b16 %v761
    %v1337 = vunpack.c.h.b16 %v761
    %v1338 = vunpack.c.l.b16 %v762
    %v1339 = vunpack.c.h.b16 %v762
    %v1340 = vunpack.c.l.b16 %v763
    %v1341 = vunpack.c.h.b16 %v763
    %v1342 = vunpack.c.l.b16 %v764
    %v1343 = vunpack.c.h.b16 %v764
    %v1344 = vunpack.c.l.b16 %v765
    %v1345 = vunpack.c.h.b16 %v765
    %v1346 = vunpack.c.l.b16 %v766
    %v1347 = vunpack.c.h.b16 %v766
    %v1348 = vunpack.c.l.b16 %v767
    %v1349 = vunpack.c.h.b16 %v767
    %v1350 = vunpack.c.l.b16 %v768
    %v1351 = vunpack.c.h.b16 %v768
    %v1352 = vunpack.c.l.b16 %v769
    %v1353 = vunpack.c.h.b16 %v769
    %v1354 = vunpack.c.l.b16 %v770
    %v1355 = vunpack.c.h.b16 %v770
    %v1356 = vunpack.c.l.b16 %v771
    %v1357 = vunpack.c.h.b16 %v771
    %v1358 = vunpack.c.l.b16 %v772
    %v1359 = vunpack.c.h.b16 %v772
    %v1360 = vunpack.c.l.b16 %v773
    %v1361 = vunpack.c.h.b16 %v773
    %v1362 = vunpack.c.l.b16 %v774
    %v1363 = vunpack.c.h.b16 %v774
    %v1364 = vunpack.c.l.b16 %v775
    %v1365 = vunpack.c.h.b16 %v775
    %v1366 = vunpack.c.l.b16 %v776
    %v1367 = vunpack.c.h.b16 %v776
    %v1368 = vunpack.c.l.b16 %v777
    %v1369 = vunpack.c.h.b16 %v777
    %v1370 = vunpack.c.l.b16 %v778
    %v1371 = vunpack.c.h.b16 %v778
    %v1372 = vunpack.c.l.b16 %v779
    %v1373 = vunpack.c.h.b16 %v779
    %v1374 = vunpack.c.l.b16 %v780
    %v1375 = vunpack.c.h.b16 %v780
    %v1376 = vunpack.c.l.b16 %v781
    %v1377 = vunpack.c.h.b16 %v781
    %v1378 = vunpack.c.l.b16 %v782
    %v1379 = vunpack.c.h.b16 %v782
    %v1380 = vunpack.c.l.b16 %v783
    %v1381 = vunpack.c.h.b16 %v783
    %v1382 = vunpack.c.l.b16 %v784
    %v1383 = vunpack.c.h.b16 %v784
    %v1384 = vunpack.c.l.b16 %v785
    %v1385 = vunpack.c.h.b16 %v785
    %v1386 = vunpack.c.l.b16 %v786
    %v1387 = vunpack.c.h.b16 %v786
    %v1388 = vunpack.c.l.b16 %v787
    %v1389 = vunpack.c.h.b16 %v787
    %v1390 = vunpack.c.l.b16 %v788
    %v1391 = vunpack.c.h.b16 %v788
    %v1392 = vunpack.c.l.b16 %v789
    %v1393 = vunpack.c.h.b16 %v789
    %v1394 = vunpack.c.l.b16 %v790
    %v1395 = vunpack.c.h.b16 %v790
    %v1396 = vunpack.c.l.b16 %v791
    %v1397 = vunpack.c.h.b16 %v791
    %v1398 = vunpack.c.l.b16 %v792
    %v1399 = vunpack.c.h.b16 %v792
    %v1400 = vunpack.c.l.b16 %v793
    %v1401 = vunpack.c.h.b16 %v793
    %v1402 = vunpack.c.l.b16 %v794
    %v1403 = vunpack.c.h.b16 %v794
    %v1404 = vunpack.c.l.b16 %v795
    %v1405 = vunpack.c.h.b16 %v795
    %v1406 = vunpack.c.l.b16 %v796
    %v1407 = vunpack.c.h.b16 %v796
    %v1408 = vunpack.c.l.b16 %v797
    %v1409 = vunpack.c.h.b16 %v797
    %v1410 = vunpack.c.l.b16 %v798
    %v1411 = vunpack.c.h.b16 %v798
    %v1412 = vunpack.c.l.b16 %v799
    %v1413 = vunpack.c.h.b16 %v799
    %v1414 = vunpack.c.l.b16 %v800
    %v1415 = vunpack.c.h.b16 %v800
    %v1416 = vunpack.c.l.b16 %v801
    %v1417 = vunpack.c.h.b16 %v801
    %v1418 = vunpack.c.l.b16 %v802
    %v1419 = vunpack.c.h.b16 %v802
    %v1420 = vunpack.c.l.b16 %v803
    %v1421 = vunpack.c.h.b16 %v803
    %v1422 = vunpack.c.l.b16 %v804
    %v1423 = vunpack.c.h.b16 %v804
    %v1424 = vunpack.c.l.b16 %v805
    %v1425 = vunpack.c.h.b16 %v805
    %v1426 = vunpack.c.l.b16 %v806
    %v1427 = vunpack.c.h.b16 %v806
    %v1428 = vunpack.c.l.b16 %v807
    %v1429 = vunpack.c.h.b16 %v807
    %v1430 = vunpack.c.l.b16 %v808
    %v1431 = vunpack.c.h.b16 %v808
    %v1432 = vunpack.c.l.b16 %v809
    %v1433 = vunpack.c.h.b16 %v809
    %v1434 = vunpack.c.l.b16 %v810
    %v1435 = vunpack.c.h.b16 %v810
    %v1436 = vunpack.c.l.b16 %v811
    %v1437 = vunpack.c.h.b16 %v811
    %v1438 = vunpack.c.l.b16 %v812
    %v1439 = vunpack.c.h.b16 %v812
    %v1440 = vunpack.c.l.b16 %v813
    %v1441 = vunpack.c.h.b16 %v813
    %v1442 = vunpack.c.l.b16 %v814
    %v1443 = vunpack.c.h.b16 %v814
    %v1444 = vunpack.c.l.b16 %v815
    %v1445 = vunpack.c.h.b16 %v815
    %v1446 = vunpack.c.l.b16 %v816
    %v1447 = vunpack.c.h.b16 %v816
    %v1448 = vunpack.c.l.b16 %v817
    %v1449 = vunpack.c.h.b16 %v817
    %v1450 = vunpack.c.l.b16 %v818
    %v1451 = vunpack.c.h.b16 %v818
    %v1452 = vunpack.c.l.b16 %v819
    %v1453 = vunpack.c.h.b16 %v819
    %v1454 = vunpack.c.l.b16 %v820
    %v1455 = vunpack.c.h.b16 %v820
    %v1456 = vunpack.c.l.b16 %v821
    %v1457 = vunpack.c.h.b16 %v821
    %v1458 = vunpack.c.l.b16 %v822
    %v1459 = vunpack.c.h.b16 %v822
    %v1460 = vunpack.c.l.b16 %v823
    %v1461 = vunpack.c.h.b16 %v823
    %v1462 = vunpack.c.l.b16 %v824
    %v1463 = vunpack.c.h.b16 %v824
    %v1464 = vunpack.c.l.b16 %v825
    %v1465 = vunpack.c.h.b16 %v825
    %v1466 = vunpack.c.l.b16 %v826
    %v1467 = vunpack.c.h.b16 %v826
    %v1468 = vunpack.c.l.b16 %v827
    %v1469 = vunpack.c.h.b16 %v827
    %v1470 = vunpack.c.l.b16 %v828
    %v1471 = vunpack.c.h.b16 %v828
    %v1472 = vunpack.c.l.b16 %v829
    %v1473 = vunpack.c.h.b16 %v829
    %v1474 = vunpack.c.l.b16 %v830
    %v1475 = vunpack.c.h.b16 %v830
    %v1476 = vunpack.c.l.b16 %v831
    %v1477 = vunpack.c.h.b16 %v831
    %v1478 = vunpack.c.l.b16 %v832
    %v1479 = vunpack.c.h.b16 %v832
    %v1480 = vunpack.c.l.b16 %v833
    %v1481 = vunpack.c.h.b16 %v833
    %v1482 = vunpack.c.l.b16 %v834
    %v1483 = vunpack.c.h.b16 %v834
    %v1484 = vunpack.c.l.b16 %v835
    %v1485 = vunpack.c.h.b16 %v835
    %v1486 = vunpack.c.l.b16 %v836
    %v1487 = vunpack.c.h.b16 %v836
    %v1488 = vunpack.c.l.b16 %v837
    %v1489 = vunpack.c.h.b16 %v837
    %v1490 = vunpack.c.l.b16 %v838
    %v1491 = vunpack.c.h.b16 %v838
    %v1492 = vunpack.c.l.b16 %v839
    %v1493 = vunpack.c.h.b16 %v839
    %v1494 = vunpack.c.l.b16 %v840
    %v1495 = vunpack.c.h.b16 %v840
    %v1496 = vunpack.c.l.b16 %v841
    %v1497 = vunpack.c.h.b16 %v841
    %v1498 = vunpack.c.l.b16 %v842
    %v1499 = vunpack.c.h.b16 %v842
    %v1500 = vunpack.c.l.b16 %v843
    %v1501 = vunpack.c.h.b16 %v843
    %v1502 = vunpack.c.l.b16 %v844
    %v1503 = vunpack.c.h.b16 %v844
    %v1504 = vunpack.c.l.b16 %v845
    %v1505 = vunpack.c.h.b16 %v845
    %v1506 = vunpack.c.l.b16 %v846
    %v1507 = vunpack.c.h.b16 %v846
    %v1508 = vunpack.c.l.b16 %v847
    %v1509 = vunpack.c.h.b16 %v847
    %v1510 = vunpack.c.l.b16 %v848
    %v1511 = vunpack.c.h.b16 %v848
    %v1512 = vunpack.c.l.b16 %v849
    %v1513 = vunpack.c.h.b16 %v849
    %v1514 = vunpack.c.l.b16 %v850
    %v1515 = vunpack.c.h.b16 %v850
    %v1516 = vunpack.c.l.b16 %v851
    %v1517 = vunpack.c.h.b16 %v851
    %v1518 = vunpack.c.l.b16 %v852
    %v1519 = vunpack.c.h.b16 %v852
    %v1520 = vunpack.c.l.b16 %v853
    %v1521 = vunpack.c.h.b16 %v853
    %v1522 = vunpack.c.l.b16 %v854
    %v1523 = vunpack.c.h.b16 %v854
    %v1524 = vunpack.c.l.b16 %v855
    %v1525 = vunpack.c.h.b16 %v855
    %v1526 = vunpack.c.l.b16 %v856
    %v1527 = vunpack.c.h.b16 %v856
    %v1528 = vunpack.c.l.b16 %v857
    %v1529 = vunpack.c.h.b16 %v857
    %v1530 = vunpack.c.l.b16 %v858
    %v1531 = vunpack.c.h.b16 %v858
    %v1532 = vunpack.c.l.b16 %v859
    %v1533 = vunpack.c.h.b16 %v859
    %v1534 = vunpack.c.l.b16 %v860
    %v1535 = vunpack.c.h.b16 %v860
    %v1536 = vunpack.c.l.b16 %v861
    %v1537 = vunpack.c.h.b16 %v861
    %v1538 = vunpack.c.l.b16 %v862
    %v1539 = vunpack.c.h.b16 %v862
    %v1540 = vunpack.c.l.b16 %v863
    %v1541 = vunpack.c.h.b16 %v863
    %v1542 = vunpack.c.l.b16 %v864
    %v1543 = vunpack.c.h.b16 %v864
    %v1544 = vunpack.c.l.b16 %v865
    %v1545 = vunpack.c.h.b16 %v865
    %v1546 = vunpack.c.l.b16 %v866
    %v1547 = vunpack.c.h.b16 %v866
    %v1548 = vunpack.c.l.b16 %v867
    %v1549 = vunpack.c.h.b16 %v867
    %v1550 = vunpack.c.l.b16 %v868
    %v1551 = vunpack.c.h.b16 %v868
    %v1552 = vunpack.c.l.b16 %v869
    %v1553 = vunpack.c.h.b16 %v869
    %v1554 = vunpack.c.l.b16 %v870
    %v1555 = vunpack.c.h.b16 %v870
    %v1556 = vunpack.c.l.b16 %v871
    %v1557 = vunpack.c.h.b16 %v871
    %v1558 = vunpack.c.l.b16 %v872
    %v1559 = vunpack.c.h.b16 %v872
    %v1560 = vunpack.c.l.b16 %v873
    %v1561 = vunpack.c.h.b16 %v873
    %v1562 = vunpack.c.l.b16 %v874
    %v1563 = vunpack.c.h.b16 %v874
    %v1564 = vunpack.c.l.b16 %v875
    %v1565 = vunpack.c.h.b16 %v875
    %v1566 = vunpack.c.l.b16 %v876
    %v1567 = vunpack.c.h.b16 %v876
    %v1568 = vunpack.c.l.b16 %v877
    %v1569 = vunpack.c.h.b16 %v877
    %v1570 = vunpack.c.l.b16 %v878
    %v1571 = vunpack.c.h.b16 %v878
    %v1572 = vunpack.c.l.b16 %v879
    %v1573 = vunpack.c.h.b16 %v879
    %v1574 = vunpack.c.l.b16 %v880
    %v1575 = vunpack.c.h.b16 %v880
    %v1576 = vunpack.c.l.b16 %v881
    %v1577 = vunpack.c.h.b16 %v881
    %v1578 = vunpack.c.l.b16 %v882
    %v1579 = vunpack.c.h.b16 %v882
    %v1580 = vunpack.c.l.b16 %v883
    %v1581 = vunpack.c.h.b16 %v883
    %v1582 = vunpack.c.l.b16 %v884
    %v1583 = vunpack.c.h.b16 %v884
    %v1584 = vunpack.c.l.b16 %v885
    %v1585 = vunpack.c.h.b16 %v885
    %v1586 = vunpack.c.l.b16 %v886
    %v1587 = vunpack.c.h.b16 %v886
    %v1588 = vunpack.c.l.b16 %v887
    %v1589 = vunpack.c.h.b16 %v887
    %v1590 = vunpack.c.l.b16 %v888
    %v1591 = vunpack.c.h.b16 %v888
    %v1592 = vunpack.c.l.b16 %v889
    %v1593 = vunpack.c.h.b16 %v889
    %v1594 = vunpack.c.l.b16 %v890
    %v1595 = vunpack.c.h.b16 %v890
    %v1596 = vunpack.c.l.b16 %v891
    %v1597 = vunpack.c.h.b16 %v891
    %v1598 = vunpack.c.l.b16 %v892
    %v1599 = vunpack.c.h.b16 %v892
    %v1600 = vunpack.c.l.b16 %v893
    %v1601 = vunpack.c.h.b16 %v893
    %v1602 = vunpack.c.l.b16 %v894
    %v1603 = vunpack.c.h.b16 %v894
    %v1604 = vunpack.c.l.b16 %v895
    %v1605 = vunpack.c.h.b16 %v895
    %v1606 = vunpack.c.l.b16 %v896
    %v1607 = vunpack.c.h.b16 %v896
    %v1608 = vunpack.c.l.b16 %v897
    %v1609 = vunpack.c.h.b16 %v897
    %v1610 = vunpack.c.l.b16 %v898
    %v1611 = vunpack.c.h.b16 %v898
    %v1612 = vunpack.c.l.b16 %v899
    %v1613 = vunpack.c.h.b16 %v899
    %v1614 = vunpack.c.l.b16 %v900
    %v1615 = vunpack.c.h.b16 %v900
    %v1616 = vunpack.c.l.b16 %v901
    %v1617 = vunpack.c.h.b16 %v901
    %v1618 = vunpack.c.l.b16 %v902
    %v1619 = vunpack.c.h.b16 %v902
    %v1620 = vunpack.c.l.b16 %v903
    %v1621 = vunpack.c.h.b16 %v903
    %v1622 = vunpack.c.l.b16 %v904
    %v1623 = vunpack.c.h.b16 %v904
    %v1624 = vunpack.c.l.b16 %v905
    %v1625 = vunpack.c.h.b16 %v905
    %v1626 = vunpack.c.l.b16 %v906
    %v1627 = vunpack.c.h.b16 %v906
    %v1628 = vunpack.c.l.b16 %v907
    %v1629 = vunpack.c.h.b16 %v907
    %v1630 = vunpack.c.l.b16 %v908
    %v1631 = vunpack.c.h.b16 %v908
    %v1632 = vunpack.c.l.b16 %v909
    %v1633 = vunpack.c.h.b16 %v909
    %v1634 = vunpack.c.l.b16 %v910
    %v1635 = vunpack.c.h.b16 %v910
    %v1636 = vunpack.c.l.b16 %v911
    %v1637 = vunpack.c.h.b16 %v911
    %v1638 = vunpack.c.l.b16 %v912
    %v1639 = vunpack.c.h.b16 %v912
    %v1640 = vunpack.c.l.b16 %v913
    %v1641 = vunpack.c.h.b16 %v913
    %v1642 = vunpack.c.l.b16 %v914
    %v1643 = vunpack.c.h.b16 %v914
    %v1644 = vunpack.c.l.b16 %v915
    %v1645 = vunpack.c.h.b16 %v915
    %v1646 = vunpack.c.l.b16 %v916
    %v1647 = vunpack.c.h.b16 %v916
    %v1648 = vunpack.c.l.b16 %v917
    %v1649 = vunpack.c.h.b16 %v917
    %v1650 = vunpack.c.l.b16 %v918
    %v1651 = vunpack.c.h.b16 %v918
    %v1652 = vunpack.c.l.b16 %v919
    %v1653 = vunpack.c.h.b16 %v919
    %v1654 = vunpack.c.l.b16 %v920
    %v1655 = vunpack.c.h.b16 %v920
    %v1656 = vunpack.c.l.b16 %v921
    %v1657 = vunpack.c.h.b16 %v921
    %v1658 = vunpack.c.l.b16 %v922
    %v1659 = vunpack.c.h.b16 %v922
    %v1660 = vunpack.c.l.b16 %v923
    %v1661 = vunpack.c.h.b16 %v923
    %v1662 = vunpack.c.l.b16 %v924
    %v1663 = vunpack.c.h.b16 %v924
    %v1664 = vunpack.c.l.b16 %v925
    %v1665 = vunpack.c.h.b16 %v925
    %v1666 = vunpack.c.l.b16 %v926
    %v1667 = vunpack.c.h.b16 %v926
    %v1668 = vunpack.c.l.b16 %v927
    %v1669 = vunpack.c.h.b16 %v927
    %v1670 = vunpack.c.l.b16 %v928
    %v1671 = vunpack.c.h.b16 %v928
    %v1672 = vunpack.c.l.b16 %v929
    %v1673 = vunpack.c.h.b16 %v929
    %v1674 = vunpack.c.l.b16 %v930
    %v1675 = vunpack.c.h.b16 %v930
    %v1676 = vunpack.c.l.b16 %v931
    %v1677 = vunpack.c.h.b16 %v931
    %v1678 = vunpack.c.l.b16 %v932
    %v1679 = vunpack.c.h.b16 %v932
    %v1680 = vunpack.c.l.b16 %v933
    %v1681 = vunpack.c.h.b16 %v933
    %v1682 = vunpack.c.l.b16 %v934
    %v1683 = vunpack.c.h.b16 %v934
    %v1684 = vunpack.c.l.b16 %v935
    %v1685 = vunpack.c.h.b16 %v935
    %v1686 = vunpack.c.l.b16 %v936
    %v1687 = vunpack.c.h.b16 %v936
    %v1688 = vunpack.c.l.b16 %v937
    %v1689 = vunpack.c.h.b16 %v937
    %v1690 = vunpack.c.l.b16 %v938
    %v1691 = vunpack.c.h.b16 %v938
    %v1692 = vunpack.c.l.b16 %v939
    %v1693 = vunpack.c.h.b16 %v939
    %v1694 = vunpack.c.l.b16 %v940
    %v1695 = vunpack.c.h.b16 %v940
    %v1696 = vunpack.c.l.b16 %v941
    %v1697 = vunpack.c.h.b16 %v941
    %v1698 = vunpack.c.l.b16 %v942
    %v1699 = vunpack.c.h.b16 %v942
    %v1700 = vunpack.c.l.b16 %v943
    %v1701 = vunpack.c.h.b16 %v943
    %v1702 = vunpack.c.l.b16 %v944
    %v1703 = vunpack.c.h.b16 %v944
    %v1704 = vunpack.c.l.b16 %v945
    %v1705 = vunpack.c.h.b16 %v945
    %v1706 = vunpack.c.l.b16 %v946
    %v1707 = vunpack.c.h.b16 %v946
    %v1708 = vunpack.c.l.b16 %v947
    %v1709 = vunpack.c.h.b16 %v947
    %v1710 = vunpack.c.l.b16 %v948
    %v1711 = vunpack.c.h.b16 %v948
    %v1712 = vunpack.c.l.b16 %v949
    %v1713 = vunpack.c.h.b16 %v949
    %v1714 = vunpack.c.l.b16 %v950
    %v1715 = vunpack.c.h.b16 %v950
    %v1716 = vunpack.c.l.b16 %v951
    %v1717 = vunpack.c.h.b16 %v951
    %v1718 = vunpack.c.l.b16 %v952
    %v1719 = vunpack.c.h.b16 %v952
    %v1720 = vunpack.c.l.b16 %v953
    %v1721 = vunpack.c.h.b16 %v953
    %v1722 = vunpack.c.l.b16 %v954
    %v1723 = vunpack.c.h.b16 %v954
    %v1724 = vunpack.c.l.b16 %v955
    %v1725 = vunpack.c.h.b16 %v955
    %v1726 = vunpack.c.l.b16 %v956
    %v1727 = vunpack.c.h.b16 %v956
    %v1728 = vunpack.c.l.b16 %v957
    %v1729 = vunpack.c.h.b16 %v957
    %v1730 = vunpack.c.l.b16 %v958
    %v1731 = vunpack.c.h.b16 %v958
    %v1732 = vunpack.c.l.b16 %v959
    %v1733 = vunpack.c.h.b16 %v959
    %v1734 = vunpack.c.l.b16 %v960
    %v1735 = vunpack.c.h.b16 %v960
    %v1736 = vunpack.c.l.b16 %v961
    %v1737 = vunpack.c.h.b16 %v961
    %v1738 = vunpack.c.l.b16 %v962
    %v1739 = vunpack.c.h.b16 %v962
    %v1740 = vunpack.c.l.b16 %v963
    %v1741 = vunpack.c.h.b16 %v963
    %v1742 = vunpack.c.l.b16 %v964
    %v1743 = vunpack.c.h.b16 %v964
    %v1744 = vunpack.c.l.b16 %v965
    %v1745 = vunpack.c.h.b16 %v965
    %v1746 = vunpack.c.l.b16 %v966
    %v1747 = vunpack.c.h.b16 %v966
    %v1748 = vunpack.c.l.b16 %v967
    %v1749 = vunpack.c.h.b16 %v967
    %v1750 = vunpack.c.l.b16 %v968
    %v1751 = vunpack.c.h.b16 %v968
    %v1752 = vunpack.c.l.b16 %v969
    %v1753 = vunpack.c.h.b16 %v969
    %v1754 = vunpack.c.l.b16 %v970
    %v1755 = vunpack.c.h.b16 %v970
    %v1756 = vunpack.c.l.b16 %v971
    %v1757 = vunpack.c.h.b16 %v971
    %v1758 = vunpack.c.l.b16 %v972
    %v1759 = vunpack.c.h.b16 %v972
    %v1760 = vunpack.c.l.b16 %v973
    %v1761 = vunpack.c.h.b16 %v973
    %v1762 = vunpack.c.l.b16 %v974
    %v1763 = vunpack.c.h.b16 %v974
    %v1764 = vunpack.c.l.b16 %v975
    %v1765 = vunpack.c.h.b16 %v975
    %v1766 = vunpack.c.l.b16 %v976
    %v1767 = vunpack.c.h.b16 %v976
    %v1768 = vunpack.c.l.b16 %v977
    %v1769 = vunpack.c.h.b16 %v977
    %v1770 = vunpack.c.l.b16 %v978
    %v1771 = vunpack.c.h.b16 %v978
    %v1772 = vunpack.c.l.b16 %v979
    %v1773 = vunpack.c.h.b16 %v979
    %v1774 = vunpack.c.l.b16 %v980
    %v1775 = vunpack.c.h.b16 %v980
    %v1776 = vunpack.c.l.b16 %v981
    %v1777 = vunpack.c.h.b16 %v981
    %v1778 = vunpack.c.l.b16 %v982
    %v1779 = vunpack.c.h.b16 %v982
    %v1780 = vunpack.c.l.b16 %v983
    %v1781 = vunpack.c.h.b16 %v983
    %v1782 = vunpack.c.l.b16 %v984
    %v1783 = vunpack.c.h.b16 %v984
    %v1784 = vunpack.c.l.b16 %v985
    %v1785 = vunpack.c.h.b16 %v985
    %v1786 = vunpack.c.l.b16 %v986
    %v1787 = vunpack.c.h.b16 %v986
    %v1788 = vunpack.c.l.b16 %v987
    %v1789 = vunpack.c.h.b16 %v987
    %v1790 = vunpack.c.l.b16 %v988
    %v1791 = vunpack.c.h.b16 %v988
    %v1792 = vunpack.c.l.b16 %v989
    %v1793 = vunpack.c.h.b16 %v989
    %v1794 = vunpack.c.l.b16 %v990
    %v1795 = vunpack.c.h.b16 %v990
    %v1796 = vunpack.c.l.b16 %v991
    %v1797 = vunpack.c.h.b16 %v991
    %v1798 = vunpack.c.l.b16 %v992
    %v1799 = vunpack.c.h.b16 %v992
    %v1800 = vunpack.c.l.b16 %v993
    %v1801 = vunpack.c.h.b16 %v993
    %v1802 = vunpack.c.l.b16 %v994
    %v1803 = vunpack.c.h.b16 %v994
    %v1804 = vunpack.c.l.b16 %v995
    %v1805 = vunpack.c.h.b16 %v995
    %v1806 = vpack.c.b16 %v1302, %v1294
    %v1807 = vpack.c.b16 %v1303, %v1295
    %v1808 = vpack.c.b16 %v1304, %v1296
    %v1809 = vpack.c.b16 %v1305, %v1297
    %v1810 = vpack.c.b16 %v1306, %v1298
    %v1811 = vpack.c.b16 %v1307, %v1299
    %v1812 = vpack.c.b16 %v1308, %v1300
    %v1813 = vpack.c.b16 %v1309, %v1301
    %v1814 = vpack.c.b16 %v1318, %v1310
    %v1815 = vpack.c.b16 %v1319, %v1311
    %v1816 = vpack.c.b16 %v1320, %v1312
    %v1817 = vpack.c.b16 %v1321, %v1313
    %v1818 = vpack.c.b16 %v1322, %v1314
    %v1819 = vpack.c.b16 %v1323, %v1315
    %v1820 = vpack.c.b16 %v1324, %v1316
    %v1821 = vpack.c.b16 %v1325, %v1317
    %v1822 = vpack.c.b16 %v1334, %v1326
    %v1823 = vpack.c.b16 %v1335, %v1327
    %v1824 = vpack.c.b16 %v1336, %v1328
    %v1825 = vpack.c.b16 %v1337, %v1329
    %v1826 = vpack.c.b16 %v1338, %v1330
    %v1827 = vpack.c.b16 %v1339, %v1331
    %v1828 = vpack.c.b16 %v1340, %v1332
    %v1829 = vpack.c.b16 %v1341, %v1333
    %v1830 = vpack.c.b16 %v1350, %v1342
    %v1831 = vpack.c.b16 %v1351, %v1343
    %v1832 = vpack.c.b16 %v1352, %v1344
    %v1833 = vpack.c.b16 %v1353, %v1345
    %v1834 = vpack.c.b16 %v1354, %v1346
    %v1835 = vpack.c.b16 %v1355, %v1347
    %v1836 = vpack.c.b16 %v1356, %v1348
    %v1837 = vpack.c.b16 %v1357, %v1349
    %v1838 = vpack.c.b16 %v1366, %v1358
    %v1839 = vpack.c.b16 %v1367, %v1359
    %v1840 = vpack.c.b16 %v1368, %v1360
    %v1841 = vpack.c.b16 %v1369, %v1361
    %v1842 = vpack.c.b16 %v1370, %v1362
    %v1843 = vpack.c.b16 %v1371, %v1363
    %v1844 = vpack.c.b16 %v1372, %v1364
    %v1845 = vpack.c.b16 %v1373, %v1365
    %v1846 = vpack.c.b16 %v1382, %v1374
    %v1847 = vpack.c.b16 %v1383, %v1375
    %v1848 = vpack.c.b16 %v1384, %v1376
    %v1849 = vpack.c.b16 %v1385, %v1377
    %v1850 = vpack.c.b16 %v1386, %v1378
    %v1851 = vpack.c.b16 %v1387, %v1379
    %v1852 = vpack.c.b16 %v1388, %v1380
    %v1853 = vpack.c.b16 %v1389, %v1381
    %v1854 = vpack.c.b16 %v1398, %v1390
    %v1855 = vpack.c.b16 %v1399, %v1391
    %v1856 = vpack.c.b16 %v1400, %v1392
    %v1857 = vpack.c.b16 %v1401, %v1393
    %v1858 = vpack.c.b16 %v1402, %v1394
    %v1859 = vpack.c.b16 %v1403, %v1395
    %v1860 = vpack.c.b16 %v1404, %v1396
    %v1861 = vpack.c.b16 %v1405, %v1397
    %v1862 = vpack.c.b16 %v1414, %v1406
    %v1863 = vpack.c.b16 %v1415, %v1407
    %v1864 = vpack.c.b16 %v1416, %v1408
    %v1865 = vpack.c.b16 %v1417, %v1409
    %v1866 = vpack.c.b16 %v1418, %v1410
    %v1867 = vpack.c.b16 %v1419, %v1411
    %v1868 = vpack.c.b16 %v1420, %v1412
    %v1869 = vpack.c.b16 %v1421, %v1413
    %v1870 = vpack.c.b16 %v1430, %v1422
    %v1871 = vpack.c.b16 %v1431, %v1423
    %v1872 = vpack.c.b16 %v1432, %v1424
    %v1873 = vpack.c.b16 %v1433, %v1425
    %v1874 = vpack.c.b16 %v1434, %v1426
    %v1875 = vpack.c.b16 %v1435, %v1427
    %v1876 = vpack.c.b16 %v1436, %v1428
    %v1877 = vpack.c.b16 %v1437, %v1429
    %v1878 = vpack.c.b16 %v1446, %v1438
    %v1879 = vpack.c.b16 %v1447, %v1439
    %v1880 = vpack.c.b16 %v1448, %v1440
    %v1881 = vpack.c.b16 %v1449, %v1441
    %v1882 = vpack.c.b16 %v1450, %v1442
    %v1883 = vpack.c.b16 %v1451, %v1443
    %v1884 = vpack.c.b16 %v1452, %v1444
    %v1885 = vpack.c.b16 %v1453, %v1445
    %v1886 = vpack.c.b16 %v1462, %v1454
    %v1887 = vpack.c.b16 %v1463, %v1455
    %v1888 = vpack.c.b16 %v1464, %v1456
    %v1889 = vpack.c.b16 %v1465, %v1457
    %v1890 = vpack.c.b16 %v1466, %v1458
    %v1891 = vpack.c.b16 %v1467, %v1459
    %v1892 = vpack.c.b16 %v1468, %v1460
    %v1893 = vpack.c.b16 %v1469, %v1461
    %v1894 = vpack.c.b16 %v1478, %v1470
    %v1895 = vpack.c.b16 %v1479, %v1471
    %v1896 = vpack.c.b16 %v1480, %v1472
    %v1897 = vpack.c.b16 %v1481, %v1473
    %v1898 = vpack.c.b16 %v1482, %v1474
    %v1899 = vpack.c.b16 %v1483, %v1475
    %v1900 = vpack.c.b16 %v1484, %v1476
    %v1901 = vpack.c.b16 %v1485, %v1477
    %v1902 = vpack.c.b16 %v1494, %v1486
    %v1903 = vpack.c.b16 %v1495, %v1487
    %v1904 = vpack.c.b16 %v1496, %v1488
    %v1905 = vpack.c.b16 %v1497, %v1489
    %v1906 = vpack.c.b16 %v1498, %v1490
    %v1907 = vpack.c.b16 %v1499, %v1491
    %v1908 = vpack.c.b16 %v1500, %v1492
    %v1909 = vpack.c.b16 %v1501, %v1493
    %v1910 = vpack.c.b16 %v1510, %v1502
    %v1911 = vpack.c.b16 %v1511, %v1503
    %v1912 = vpack.c.b16 %v1512, %v1504
    %v1913 = vpack.c.b16 %v1513, %v1505
    %v1914 = vpack.c.b16 %v1514, %v1506
    %v1915 = vpack.c.b16 %v1515, %v1507
    %v1916 = vpack.c.b16 %v1516, %v1508
    %v1917 = vpack.c.b16 %v1517, %v1509
    %v1918 = vpack.c.b16 %v1526, %v1518
    %v1919 = vpack.c.b16 %v1527, %v1519
    %v1920 = vpack.c.b16 %v1528, %v1520
    %v1921 = vpack.c.b16 %v1529, %v1521
    %v1922 = vpack.c.b16 %v1530, %v1522
    %v1923 = vpack.c.b16 %v1531, %v1523
    %v1924 = vpack.c.b16 %v1532, %v1524
    %v1925 = vpack.c.b16 %v1533, %v1525
    %v1926 = vpack.c.b16 %v1542, %v1534
    %v1927 = vpack.c.b16 %v1543, %v1535
    %v1928 = vpack.c.b16 %v1544, %v1536
    %v1929 = vpack.c.b16 %v1545, %v1537
    %v1930 = vpack.c.b16 %v1546, %v1538
    %v1931 = vpack.c.b16 %v1547, %v1539
    %v1932 = vpack.c.b16 %v1548, %v1540
    %v1933 = vpack.c.b16 %v1549, %v1541
    %v1934 = vpack.c.b16 %v1558, %v1550
    %v1935 = vpack.c.b16 %v1559, %v1551
    %v1936 = vpack.c.b16 %v1560, %v1552
    %v1937 = vpack.c.b16 %v1561, %v1553
    %v1938 = vpack.c.b16 %v1562, %v1554
    %v1939 = vpack.c.b16 %v1563, %v1555
    %v1940 = vpack.c.b16 %v1564, %v1556
    %v1941 = vpack.c.b16 %v1565, %v1557
    %v1942 = vpack.c.b16 %v1574, %v1566
    %v1943 = vpack.c.b16 %v1575, %v1567
    %v1944 = vpack.c.b16 %v1576, %v1568
    %v1945 = vpack.c.b16 %v1577, %v1569
    %v1946 = vpack.c.b16 %v1578, %v1570
    %v1947 = vpack.c.b16 %v1579, %v1571
    %v1948 = vpack.c.b16 %v1580, %v1572
    %v1949 = vpack.c.b16 %v1581, %v1573
    %v1950 = vpack.c.b16 %v1590, %v1582
    %v1951 = vpack.c.b16 %v1591, %v1583
    %v1952 = vpack.c.b16 %v1592, %v1584
    %v1953 = vpack.c.b16 %v1593, %v1585
    %v1954 = vpack.c.b16 %v1594, %v1586
    %v1955 = vpack.c.b16 %v1595, %v1587
    %v1956 = vpack.c.b16 %v1596, %v1588
    %v1957 = vpack.c.b16 %v1597, %v1589
    %v1958 = vpack.c.b16 %v1606, %v1598
    %v1959 = vpack.c.b16 %v1607, %v1599
    %v1960 = vpack.c.b16 %v1608, %v1600
    %v1961 = vpack.c.b16 %v1609, %v1601
    %v1962 = vpack.c.b16 %v1610, %v1602
    %v1963 = vpack.c.b16 %v1611, %v1603
    %v1964 = vpack.c.b16 %v1612, %v1604
    %v1965 = vpack.c.b16 %v1613, %v1605
    %v1966 = vpack.c.b16 %v1622, %v1614
    %v1967 = vpack.c.b16 %v1623, %v1615
    %v1968 = vpack.c.b16 %v1624, %v1616
    %v1969 = vpack.c.b16 %v1625, %v1617
    %v1970 = vpack.c.b16 %v1626, %v1618
    %v1971 = vpack.c.b16 %v1627, %v1619
    %v1972 = vpack.c.b16 %v1628, %v1620
    %v1973 = vpack.c.b16 %v1629, %v1621
    %v1974 = vpack.c.b16 %v1638, %v1630
    %v1975 = vpack.c.b16 %v1639, %v1631
    %v1976 = vpack.c.b16 %v1640, %v1632
    %v1977 = vpack.c.b16 %v1641, %v1633
    %v1978 = vpack.c.b16 %v1642, %v1634
    %v1979 = vpack.c.b16 %v1643, %v1635
    %v1980 = vpack.c.b16 %v1644, %v1636
    %v1981 = vpack.c.b16 %v1645, %v1637
    %v1982 = vpack.c.b16 %v1654, %v1646
    %v1983 = vpack.c.b16 %v1655, %v1647
    %v1984 = vpack.c.b16 %v1656, %v1648
    %v1985 = vpack.c.b16 %v1657, %v1649
    %v1986 = vpack.c.b16 %v1658, %v1650
    %v1987 = vpack.c.b16 %v1659, %v1651
    %v1988 = vpack.c.b16 %v1660, %v1652
    %v1989 = vpack.c.b16 %v1661, %v1653
    %v1990 = vpack.c.b16 %v1670, %v1662
    %v1991 = vpack.c.b16 %v1671, %v1663
    %v1992 = vpack.c.b16 %v1672, %v1664
    %v1993 = vpack.c.b16 %v1673, %v1665
    %v1994 = vpack.c.b16 %v1674, %v1666
    %v1995 = vpack.c.b16 %v1675, %v1667
    %v1996 = vpack.c.b16 %v1676, %v1668
    %v1997 = vpack.c.b16 %v1677, %v1669
    %v1998 = vpack.c.b16 %v1686, %v1678
    %v1999 = vpack.c.b16 %v1687, %v1679
    %v2000 = vpack.c.b16 %v1688, %v1680
    %v2001 = vpack.c.b16 %v1689, %v1681
    %v2002 = vpack.c.b16 %v1690, %v1682
    %v2003 = vpack.c.b16 %v1691, %v1683
    %v2004 = vpack.c.b16 %v1692, %v1684
    %v2005 = vpack.c.b16 %v1693, %v1685
    %v2006 = vpack.c.b16 %v1702, %v1694
    %v2007 = vpack.c.b16 %v1703, %v1695
    %v2008 = vpack.c.b16 %v1704, %v1696
    %v2009 = vpack.c.b16 %v1705, %v1697
    %v2010 = vpack.c.b16 %v1706, %v1698
    %v2011 = vpack.c.b16 %v1707, %v1699
    %v2012 = vpack.c.b16 %v1708, %v1700
    %v2013 = vpack.c.b16 %v1709, %v1701
    %v2014 = vpack.c.b16 %v1718, %v1710
    %v2015 = vpack.c.b16 %v1719, %v1711
    %v2016 = vpack.c.b16 %v1720, %v1712
    %v2017 = vpack.c.b16 %v1721, %v1713
    %v2018 = vpack.c.b16 %v1722, %v1714
    %v2019 = vpack.c.b16 %v1723, %v1715
    %v2020 = vpack.c.b16 %v1724, %v1716
    %v2021 = vpack.c.b16 %v1725, %v1717
    %v2022 = vpack.c.b16 %v1734, %v1726
    %v2023 = vpack.c.b16 %v1735, %v1727
    %v2024 = vpack.c.b16 %v1736, %v1728
    %v2025 = vpack.c.b16 %v1737, %v1729
    %v2026 = vpack.c.b16 %v1738, %v1730
    %v2027 = vpack.c.b16 %v1739, %v1731
    %v2028 = vpack.c.b16 %v1740, %v1732
    %v2029 = vpack.c.b16 %v1741, %v1733
    %v2030 = vpack.c.b16 %v1750, %v1742
    %v2031 = vpack.c.b16 %v1751, %v1743
    %v2032 = vpack.c.b16 %v1752, %v1744
    %v2033 = vpack.c.b16 %v1753, %v1745
    %v2034 = vpack.c.b16 %v1754, %v1746
    %v2035 = vpack.c.b16 %v1755, %v1747
    %v2036 = vpack.c.b16 %v1756, %v1748
    %v2037 = vpack.c.b16 %v1757, %v1749
    %v2038 = vpack.c.b16 %v1766, %v1758
    %v2039 = vpack.c.b16 %v1767, %v1759
    %v2040 = vpack.c.b16 %v1768, %v1760
    %v2041 = vpack.c.b16 %v1769, %v1761
    %v2042 = vpack.c.b16 %v1770, %v1762
    %v2043 = vpack.c.b16 %v1771, %v1763
    %v2044 = vpack.c.b16 %v1772, %v1764
    %v2045 = vpack.c.b16 %v1773, %v1765
    %v2046 = vpack.c.b16 %v1782, %v1774
    %v2047 = vpack.c.b16 %v1783, %v1775
    %v2048 = vpack.c.b16 %v1784, %v1776
    %v2049 = vpack.c.b16 %v1785, %v1777
    %v2050 = vpack.c.b16 %v1786, %v1778
    %v2051 = vpack.c.b16 %v1787, %v1779
    %v2052 = vpack.c.b16 %v1788, %v1780
    %v2053 = vpack.c.b16 %v1789, %v1781
    %v2054 = vpack.c.b16 %v1798, %v1790
    %v2055 = vpack.c.b16 %v1799, %v1791
    %v2056 = vpack.c.b16 %v1800, %v1792
    %v2057 = vpack.c.b16 %v1801, %v1793
    %v2058 = vpack.c.b16 %v1802, %v1794
    %v2059 = vpack.c.b16 %v1803, %v1795
    %v2060 = vpack.c.b16 %v1804, %v1796
    %v2061 = vpack.c.b16 %v1805, %v1797
    %2318 = vmatprep.subr.bf16.mxu0 %v1807
    %2319 = vmatpush1.bf16.msra.mxu0 %v1806
    %2320 = vmatprep.subr.bf16.mxu0 %v1815
    %2321 = vmatpush1.bf16.msra.mxu0 %v1814
    %2322 = vmatprep.subr.bf16.mxu0 %v1823
    %2323 = vmatpush1.bf16.msra.mxu0 %v1822
    %2324 = vmatprep.subr.bf16.mxu0 %v1831
    %2325 = vmatpush1.bf16.msra.mxu0 %v1830
    %2326 = vmatprep.subr.bf16.mxu0 %v1839
    %2327 = vmatpush1.bf16.msra.mxu0 %v1838
    %2328 = vmatprep.subr.bf16.mxu0 %v1847
    %2329 = vmatpush1.bf16.msra.mxu0 %v1846
    %2330 = vmatprep.subr.bf16.mxu0 %v1855
    %2331 = vmatpush1.bf16.msra.mxu0 %v1854
    %2332 = vmatprep.subr.bf16.mxu0 %v1863
    %2333 = vmatpush1.bf16.msra.mxu0 %v1862
    %2334 = vmatprep.subr.bf16.mxu0 %v1871
    %2335 = vmatpush1.bf16.msra.mxu0 %v1870
    %2336 = vmatprep.subr.bf16.mxu0 %v1879
    %2337 = vmatpush1.bf16.msra.mxu0 %v1878
    %2338 = vmatprep.subr.bf16.mxu0 %v1887
    %2339 = vmatpush1.bf16.msra.mxu0 %v1886
    %2340 = vmatprep.subr.bf16.mxu0 %v1895
    %2341 = vmatpush1.bf16.msra.mxu0 %v1894
    %2342 = vmatprep.subr.bf16.mxu0 %v1903
    %2343 = vmatpush1.bf16.msra.mxu0 %v1902
    %2344 = vmatprep.subr.bf16.mxu0 %v1911
    %2345 = vmatpush1.bf16.msra.mxu0 %v1910
    %2346 = vmatprep.subr.bf16.mxu0 %v1919
    %2347 = vmatpush1.bf16.msra.mxu0 %v1918
    %2348 = vmatprep.subr.bf16.mxu0 %v1927
    %2349 = vmatpush1.bf16.msra.mxu0 %v1926
    %2350 = vmatprep.mubr.bf16.mxu0 %v737
    %2351 = vmatmul.mubr.bf16.gmra.mrb[0].mxu0 %v736
    %v2352 = vpop.f32.mrb[0].mxu0
    %v2353 = vadd.f32 %v1001, %v2352
    %v2354 = vpop.f32.mrb[0].mxu0
    %v2355 = vadd.f32 %v1005, %v2354
    %v2356 = vpop.f32.mrb[0].mxu0
    %v2357 = vpop.f32.mrb[0].mxu0
    %2358 = vdwg.mxu0
    %2359 = vmatprep.subr.bf16.mxu0 %v1935
    %2360 = vmatpush1.bf16.msra.mxu0 %v1934
    %2361 = vmatprep.subr.bf16.mxu0 %v1943
    %2362 = vmatpush1.bf16.msra.mxu0 %v1942
    %2363 = vmatprep.subr.bf16.mxu0 %v1951
    %2364 = vmatpush1.bf16.msra.mxu0 %v1950
    %2365 = vmatprep.subr.bf16.mxu0 %v1959
    %2366 = vmatpush1.bf16.msra.mxu0 %v1958
    %2367 = vmatprep.subr.bf16.mxu0 %v1967
    %2368 = vmatpush1.bf16.msra.mxu0 %v1966
    %2369 = vmatprep.subr.bf16.mxu0 %v1975
    %2370 = vmatpush1.bf16.msra.mxu0 %v1974
    %2371 = vmatprep.subr.bf16.mxu0 %v1983
    %2372 = vmatpush1.bf16.msra.mxu0 %v1982
    %2373 = vmatprep.subr.bf16.mxu0 %v1991
    %2374 = vmatpush1.bf16.msra.mxu0 %v1990
    %2375 = vmatprep.subr.bf16.mxu0 %v1999
    %2376 = vmatpush1.bf16.msra.mxu0 %v1998
    %2377 = vmatprep.subr.bf16.mxu0 %v2007
    %2378 = vmatpush1.bf16.msra.mxu0 %v2006
    %2379 = vmatprep.subr.bf16.mxu0 %v2015
    %2380 = vmatpush1.bf16.msra.mxu0 %v2014
    %2381 = vmatprep.subr.bf16.mxu0 %v2023
    %2382 = vmatpush1.bf16.msra.mxu0 %v2022
    %2383 = vmatprep.subr.bf16.mxu0 %v2031
    %2384 = vmatpush1.bf16.msra.mxu0 %v2030
    %2385 = vmatprep.subr.bf16.mxu0 %v2039
    %2386 = vmatpush1.bf16.msra.mxu0 %v2038
    %2387 = vmatprep.subr.bf16.mxu0 %v2047
    %2388 = vmatpush1.bf16.msra.mxu0 %v2046
    %2389 = vmatprep.subr.bf16.mxu0 %v2055
    %2390 = vmatpush1.bf16.msra.mxu0 %v2054
    %2391 = vmatprep.mubr.bf16.mxu0 %v739
    %2392 = vmatmul.mubr.bf16.gmra.mrb[0].mxu0 %v738
    %v2393 = vpop.f32.mrb[0].mxu0
    %v2394 = vadd.f32 %v2353, %v2393
    %v2395 = vpop.f32.mrb[0].mxu0
    %v2396 = vadd.f32 %v2355, %v2395
    %v2397 = vpop.f32.mrb[0].mxu0
    %v2398 = vpop.f32.mrb[0].mxu0
    %2399 = vdwg.mxu0
    %2400 = vmatprep.subr.bf16.mxu0 %v1809
    %2401 = vmatpush1.bf16.msra.mxu0 %v1808
    %2402 = vmatprep.subr.bf16.mxu0 %v1817
    %2403 = vmatpush1.bf16.msra.mxu0 %v1816
    %2404 = vmatprep.subr.bf16.mxu0 %v1825
    %2405 = vmatpush1.bf16.msra.mxu0 %v1824
    %2406 = vmatprep.subr.bf16.mxu0 %v1833
    %2407 = vmatpush1.bf16.msra.mxu0 %v1832
    %2408 = vmatprep.subr.bf16.mxu0 %v1841
    %2409 = vmatpush1.bf16.msra.mxu0 %v1840
    %2410 = vmatprep.subr.bf16.mxu0 %v1849
    %2411 = vmatpush1.bf16.msra.mxu0 %v1848
    %2412 = vmatprep.subr.bf16.mxu0 %v1857
    %2413 = vmatpush1.bf16.msra.mxu0 %v1856
    %2414 = vmatprep.subr.bf16.mxu0 %v1865
    %2415 = vmatpush1.bf16.msra.mxu0 %v1864
    %2416 = vmatprep.subr.bf16.mxu0 %v1873
    %2417 = vmatpush1.bf16.msra.mxu0 %v1872
    %2418 = vmatprep.subr.bf16.mxu0 %v1881
    %2419 = vmatpush1.bf16.msra.mxu0 %v1880
    %2420 = vmatprep.subr.bf16.mxu0 %v1889
    %2421 = vmatpush1.bf16.msra.mxu0 %v1888
    %2422 = vmatprep.subr.bf16.mxu0 %v1897
    %2423 = vmatpush1.bf16.msra.mxu0 %v1896
    %2424 = vmatprep.subr.bf16.mxu0 %v1905
    %2425 = vmatpush1.bf16.msra.mxu0 %v1904
    %2426 = vmatprep.subr.bf16.mxu0 %v1913
    %2427 = vmatpush1.bf16.msra.mxu0 %v1912
    %2428 = vmatprep.subr.bf16.mxu0 %v1921
    %2429 = vmatpush1.bf16.msra.mxu0 %v1920
    %2430 = vmatprep.subr.bf16.mxu0 %v1929
    %2431 = vmatpush1.bf16.msra.mxu0 %v1928
    %2432 = vmatprep.mubr.bf16.mxu0 %v737
    %2433 = vmatmul.mubr.bf16.gmra.mrb[0].mxu0 %v736
    %v2434 = vpop.f32.mrb[0].mxu0
    %v2435 = vadd.f32 %v1009, %v2434
    %v2436 = vpop.f32.mrb[0].mxu0
    %v2437 = vadd.f32 %v1013, %v2436
    %v2438 = vpop.f32.mrb[0].mxu0
    %v2439 = vpop.f32.mrb[0].mxu0
    %2440 = vdwg.mxu0
    %2441 = vmatprep.subr.bf16.mxu0 %v1937
    %2442 = vmatpush1.bf16.msra.mxu0 %v1936
    %2443 = vmatprep.subr.bf16.mxu0 %v1945
    %2444 = vmatpush1.bf16.msra.mxu0 %v1944
    %2445 = vmatprep.subr.bf16.mxu0 %v1953
    %2446 = vmatpush1.bf16.msra.mxu0 %v1952
    %2447 = vmatprep.subr.bf16.mxu0 %v1961
    %2448 = vmatpush1.bf16.msra.mxu0 %v1960
    %2449 = vmatprep.subr.bf16.mxu0 %v1969
    %2450 = vmatpush1.bf16.msra.mxu0 %v1968
    %2451 = vmatprep.subr.bf16.mxu0 %v1977
    %2452 = vmatpush1.bf16.msra.mxu0 %v1976
    %2453 = vmatprep.subr.bf16.mxu0 %v1985
    %2454 = vmatpush1.bf16.msra.mxu0 %v1984
    %2455 = vmatprep.subr.bf16.mxu0 %v1993
    %2456 = vmatpush1.bf16.msra.mxu0 %v1992
    %2457 = vmatprep.subr.bf16.mxu0 %v2001
    %2458 = vmatpush1.bf16.msra.mxu0 %v2000
    %2459 = vmatprep.subr.bf16.mxu0 %v2009
    %2460 = vmatpush1.bf16.msra.mxu0 %v2008
    %2461 = vmatprep.subr.bf16.mxu0 %v2017
    %2462 = vmatpush1.bf16.msra.mxu0 %v2016
    %2463 = vmatprep.subr.bf16.mxu0 %v2025
    %2464 = vmatpush1.bf16.msra.mxu0 %v2024
    %2465 = vmatprep.subr.bf16.mxu0 %v2033
    %2466 = vmatpush1.bf16.msra.mxu0 %v2032
    %2467 = vmatprep.subr.bf16.mxu0 %v2041
    %2468 = vmatpush1.bf16.msra.mxu0 %v2040
    %2469 = vmatprep.subr.bf16.mxu0 %v2049
    %2470 = vmatpush1.bf16.msra.mxu0 %v2048
    %2471 = vmatprep.subr.bf16.mxu0 %v2057
    %2472 = vmatpush1.bf16.msra.mxu0 %v2056
    %2473 = vmatprep.mubr.bf16.mxu0 %v739
    %2474 = vmatmul.mubr.bf16.gmra.mrb[0].mxu0 %v738
    %v2475 = vpop.f32.mrb[0].mxu0
    %v2476 = vadd.f32 %v2435, %v2475
    %v2477 = vpop.f32.mrb[0].mxu0
    %v2478 = vadd.f32 %v2437, %v2477
    %v2479 = vpop.f32.mrb[0].mxu0
    %v2480 = vpop.f32.mrb[0].mxu0
    %2481 = vdwg.mxu0
    %2482 = vmatprep.subr.bf16.mxu0 %v1811
    %2483 = vmatpush1.bf16.msra.mxu0 %v1810
    %2484 = vmatprep.subr.bf16.mxu0 %v1819
    %2485 = vmatpush1.bf16.msra.mxu0 %v1818
    %2486 = vmatprep.subr.bf16.mxu0 %v1827
    %2487 = vmatpush1.bf16.msra.mxu0 %v1826
    %2488 = vmatprep.subr.bf16.mxu0 %v1835
    %2489 = vmatpush1.bf16.msra.mxu0 %v1834
    %2490 = vmatprep.subr.bf16.mxu0 %v1843
    %2491 = vmatpush1.bf16.msra.mxu0 %v1842
    %2492 = vmatprep.subr.bf16.mxu0 %v1851
    %2493 = vmatpush1.bf16.msra.mxu0 %v1850
    %2494 = vmatprep.subr.bf16.mxu0 %v1859
    %2495 = vmatpush1.bf16.msra.mxu0 %v1858
    %2496 = vmatprep.subr.bf16.mxu0 %v1867
    %2497 = vmatpush1.bf16.msra.mxu0 %v1866
    %2498 = vmatprep.subr.bf16.mxu0 %v1875
    %2499 = vmatpush1.bf16.msra.mxu0 %v1874
    %2500 = vmatprep.subr.bf16.mxu0 %v1883
    %2501 = vmatpush1.bf16.msra.mxu0 %v1882
    %2502 = vmatprep.subr.bf16.mxu0 %v1891
    %2503 = vmatpush1.bf16.msra.mxu0 %v1890
    %2504 = vmatprep.subr.bf16.mxu0 %v1899
    %2505 = vmatpush1.bf16.msra.mxu0 %v1898
    %2506 = vmatprep.subr.bf16.mxu0 %v1907
    %2507 = vmatpush1.bf16.msra.mxu0 %v1906
    %2508 = vmatprep.subr.bf16.mxu0 %v1915
    %2509 = vmatpush1.bf16.msra.mxu0 %v1914
    %2510 = vmatprep.subr.bf16.mxu0 %v1923
    %2511 = vmatpush1.bf16.msra.mxu0 %v1922
    %2512 = vmatprep.subr.bf16.mxu0 %v1931
    %2513 = vmatpush1.bf16.msra.mxu0 %v1930
    %2514 = vmatprep.mubr.bf16.mxu0 %v737
    %2515 = vmatmul.mubr.bf16.gmra.mrb[0].mxu0 %v736
    %v2516 = vpop.f32.mrb[0].mxu0
    %v2517 = vadd.f32 %v1017, %v2516
    %v2518 = vpop.f32.mrb[0].mxu0
    %v2519 = vadd.f32 %v1021, %v2518
    %v2520 = vpop.f32.mrb[0].mxu0
    %v2521 = vpop.f32.mrb[0].mxu0
    %2522 = vdwg.mxu0
    %2523 = vmatprep.subr.bf16.mxu0 %v1939
    %2524 = vmatpush1.bf16.msra.mxu0 %v1938
    %2525 = vmatprep.subr.bf16.mxu0 %v1947
    %2526 = vmatpush1.bf16.msra.mxu0 %v1946
    %2527 = vmatprep.subr.bf16.mxu0 %v1955
    %2528 = vmatpush1.bf16.msra.mxu0 %v1954
    %2529 = vmatprep.subr.bf16.mxu0 %v1963
    %2530 = vmatpush1.bf16.msra.mxu0 %v1962
    %2531 = vmatprep.subr.bf16.mxu0 %v1971
    %2532 = vmatpush1.bf16.msra.mxu0 %v1970
    %2533 = vmatprep.subr.bf16.mxu0 %v1979
    %2534 = vmatpush1.bf16.msra.mxu0 %v1978
    %2535 = vmatprep.subr.bf16.mxu0 %v1987
    %2536 = vmatpush1.bf16.msra.mxu0 %v1986
    %2537 = vmatprep.subr.bf16.mxu0 %v1995
    %2538 = vmatpush1.bf16.msra.mxu0 %v1994
    %2539 = vmatprep.subr.bf16.mxu0 %v2003
    %2540 = vmatpush1.bf16.msra.mxu0 %v2002
    %2541 = vmatprep.subr.bf16.mxu0 %v2011
    %2542 = vmatpush1.bf16.msra.mxu0 %v2010
    %2543 = vmatprep.subr.bf16.mxu0 %v2019
    %2544 = vmatpush1.bf16.msra.mxu0 %v2018
    %2545 = vmatprep.subr.bf16.mxu0 %v2027
    %2546 = vmatpush1.bf16.msra.mxu0 %v2026
    %2547 = vmatprep.subr.bf16.mxu0 %v2035
    %2548 = vmatpush1.bf16.msra.mxu0 %v2034
    %2549 = vmatprep.subr.bf16.mxu0 %v2043
    %2550 = vmatpush1.bf16.msra.mxu0 %v2042
    %2551 = vmatprep.subr.bf16.mxu0 %v2051
    %2552 = vmatpush1.bf16.msra.mxu0 %v2050
    %2553 = vmatprep.subr.bf16.mxu0 %v2059
    %2554 = vmatpush1.bf16.msra.mxu0 %v2058
    %2555 = vmatprep.mubr.bf16.mxu0 %v739
    %2556 = vmatmul.mubr.bf16.gmra.mrb[0].mxu0 %v738
    %v2557 = vpop.f32.mrb[0].mxu0
    %v2558 = vadd.f32 %v2517, %v2557
    %v2559 = vpop.f32.mrb[0].mxu0
    %v2560 = vadd.f32 %v2519, %v2559
    %v2561 = vpop.f32.mrb[0].mxu0
    %v2562 = vpop.f32.mrb[0].mxu0
    %2563 = vdwg.mxu0
    %2564 = vmatprep.subr.bf16.mxu0 %v1813
    %2565 = vmatpush1.bf16.msra.mxu0 %v1812
    %2566 = vmatprep.subr.bf16.mxu0 %v1821
    %2567 = vmatpush1.bf16.msra.mxu0 %v1820
    %2568 = vmatprep.subr.bf16.mxu0 %v1829
    %2569 = vmatpush1.bf16.msra.mxu0 %v1828
    %2570 = vmatprep.subr.bf16.mxu0 %v1837
    %2571 = vmatpush1.bf16.msra.mxu0 %v1836
    %2572 = vmatprep.subr.bf16.mxu0 %v1845
    %2573 = vmatpush1.bf16.msra.mxu0 %v1844
    %2574 = vmatprep.subr.bf16.mxu0 %v1853
    %2575 = vmatpush1.bf16.msra.mxu0 %v1852
    %2576 = vmatprep.subr.bf16.mxu0 %v1861
    %2577 = vmatpush1.bf16.msra.mxu0 %v1860
    %2578 = vmatprep.subr.bf16.mxu0 %v1869
    %2579 = vmatpush1.bf16.msra.mxu0 %v1868
    %2580 = vmatprep.subr.bf16.mxu0 %v1877
    %2581 = vmatpush1.bf16.msra.mxu0 %v1876
    %2582 = vmatprep.subr.bf16.mxu0 %v1885
    %2583 = vmatpush1.bf16.msra.mxu0 %v1884
    %2584 = vmatprep.subr.bf16.mxu0 %v1893
    %2585 = vmatpush1.bf16.msra.mxu0 %v1892
    %2586 = vmatprep.subr.bf16.mxu0 %v1901
    %2587 = vmatpush1.bf16.msra.mxu0 %v1900
    %2588 = vmatprep.subr.bf16.mxu0 %v1909
    %2589 = vmatpush1.bf16.msra.mxu0 %v1908
    %2590 = vmatprep.subr.bf16.mxu0 %v1917
    %2591 = vmatpush1.bf16.msra.mxu0 %v1916
    %2592 = vmatprep.subr.bf16.mxu0 %v1925
    %2593 = vmatpush1.bf16.msra.mxu0 %v1924
    %2594 = vmatprep.subr.bf16.mxu0 %v1933
    %2595 = vmatpush1.bf16.msra.mxu0 %v1932
    %2596 = vmatprep.mubr.bf16.mxu0 %v737
    %2597 = vmatmul.mubr.bf16.gmra.mrb[0].mxu0 %v736
    %v2598 = vpop.f32.mrb[0].mxu0
    %v2599 = vadd.f32 %v1025, %v2598
    %v2600 = vpop.f32.mrb[0].mxu0
    %v2601 = vadd.f32 %v1029, %v2600
    %v2602 = vpop.f32.mrb[0].mxu0
    %v2603 = vpop.f32.mrb[0].mxu0
    %2604 = vdwg.mxu0
    %2605 = vmatprep.subr.bf16.mxu0 %v1941
    %2606 = vmatpush1.bf16.msra.mxu0 %v1940
    %2607 = vmatprep.subr.bf16.mxu0 %v1949
    %2608 = vmatpush1.bf16.msra.mxu0 %v1948
    %2609 = vmatprep.subr.bf16.mxu0 %v1957
    %2610 = vmatpush1.bf16.msra.mxu0 %v1956
    %2611 = vmatprep.subr.bf16.mxu0 %v1965
    %2612 = vmatpush1.bf16.msra.mxu0 %v1964
    %2613 = vmatprep.subr.bf16.mxu0 %v1973
    %2614 = vmatpush1.bf16.msra.mxu0 %v1972
    %2615 = vmatprep.subr.bf16.mxu0 %v1981
    %2616 = vmatpush1.bf16.msra.mxu0 %v1980
    %2617 = vmatprep.subr.bf16.mxu0 %v1989
    %2618 = vmatpush1.bf16.msra.mxu0 %v1988
    %2619 = vmatprep.subr.bf16.mxu0 %v1997
    %2620 = vmatpush1.bf16.msra.mxu0 %v1996
    %2621 = vmatprep.subr.bf16.mxu0 %v2005
    %2622 = vmatpush1.bf16.msra.mxu0 %v2004
    %2623 = vmatprep.subr.bf16.mxu0 %v2013
    %2624 = vmatpush1.bf16.msra.mxu0 %v2012
    %2625 = vmatprep.subr.bf16.mxu0 %v2021
    %2626 = vmatpush1.bf16.msra.mxu0 %v2020
    %2627 = vmatprep.subr.bf16.mxu0 %v2029
    %2628 = vmatpush1.bf16.msra.mxu0 %v2028
    %2629 = vmatprep.subr.bf16.mxu0 %v2037
    %2630 = vmatpush1.bf16.msra.mxu0 %v2036
    %2631 = vmatprep.subr.bf16.mxu0 %v2045
    %2632 = vmatpush1.bf16.msra.mxu0 %v2044
    %2633 = vmatprep.subr.bf16.mxu0 %v2053
    %2634 = vmatpush1.bf16.msra.mxu0 %v2052
    %2635 = vmatprep.subr.bf16.mxu0 %v2061
    %2636 = vmatpush1.bf16.msra.mxu0 %v2060
    %2637 = vmatprep.mubr.bf16.mxu0 %v739
    %2638 = vmatmul.mubr.bf16.gmra.mrb[0].mxu0 %v738
    %v2639 = vpop.f32.mrb[0].mxu0
    %v2640 = vadd.f32 %v2599, %v2639
    %v2641 = vpop.f32.mrb[0].mxu0
    %v2642 = vadd.f32 %v2601, %v2641
    %v2643 = vpop.f32.mrb[0].mxu0
    %v2644 = vpop.f32.mrb[0].mxu0
    %2645 = vdwg.mxu0
    %v2646 = vmax.f32 %v2394, 0.0
    %v2647 = vmax.f32 %v2396, 0.0
    %v2648 = vmax.f32 %v2476, 0.0
    %v2649 = vmax.f32 %v2478, 0.0
    %v2650 = vmax.f32 %v2558, 0.0
    %v2651 = vmax.f32 %v2560, 0.0
    %v2652 = vmax.f32 %v2640, 0.0
    %v2653 = vmax.f32 %v2642, 0.0
    %v2654 = vpack.c.bf16 %v2646, %v2646
    %v2655 = vpack.c.bf16 %v2647, %v2647
    %v2656 = vpack.c.bf16 %v2648, %v2648
    %v2657 = vpack.c.bf16 %v2649, %v2649
    %v2658 = vpack.c.bf16 %v2650, %v2650
    %v2659 = vpack.c.bf16 %v2651, %v2651
    %v2660 = vpack.c.bf16 %v2652, %v2652
    %v2661 = vpack.c.bf16 %v2653, %v2653
    %v2662 = vld [vmem:[#allocation8] sm:$0xf]
    %v2663 = vld [vmem:[#allocation8 + $0x4] sm:$0xf]
    %v2664 = vld [vmem:[#allocation8 + $0x8] sm:$0xf]
    %v2665 = vld [vmem:[#allocation8 + $0xc] sm:$0xf]
    %v2666 = vld [vmem:[#allocation8 + $0x10] sm:$0xf]
    %v2667 = vld [vmem:[#allocation8 + $0x14] sm:$0xf]
    %v2668 = vld [vmem:[#allocation8 + $0x18] sm:$0xf]
    %v2669 = vld [vmem:[#allocation8 + $0x1c] sm:$0xf]
    %v2670 = vld [vmem:[#allocation8 + $0x20] sm:$0xf]
    %v2671 = vld [vmem:[#allocation8 + $0x24] sm:$0xf]
    %v2672 = vld [vmem:[#allocation8 + $0x28] sm:$0xf]
    %v2673 = vld [vmem:[#allocation8 + $0x2c] sm:$0xf]
    %v2674 = vld [vmem:[#allocation8 + $0x30] sm:$0xf]
    %v2675 = vld [vmem:[#allocation8 + $0x34] sm:$0xf]
    %v2676 = vld [vmem:[#allocation8 + $0x38] sm:$0xf]
    %v2677 = vld [vmem:[#allocation8 + $0x3c] sm:$0xf]
    %v2678 = vld [vmem:[#allocation8 + $0x40] sm:$0xf]
    %v2679 = vld [vmem:[#allocation8 + $0x44] sm:$0xf]
    %v2680 = vld [vmem:[#allocation8 + $0x48] sm:$0xf]
    %v2681 = vld [vmem:[#allocation8 + $0x4c] sm:$0xf]
    %v2682 = vld [vmem:[#allocation8 + $0x50] sm:$0xf]
    %v2683 = vld [vmem:[#allocation8 + $0x54] sm:$0xf]
    %v2684 = vld [vmem:[#allocation8 + $0x58] sm:$0xf]
    %v2685 = vld [vmem:[#allocation8 + $0x5c] sm:$0xf]
    %v2686 = vld [vmem:[#allocation8 + $0x60] sm:$0xf]
    %v2687 = vld [vmem:[#allocation8 + $0x64] sm:$0xf]
    %v2688 = vld [vmem:[#allocation8 + $0x68] sm:$0xf]
    %v2689 = vld [vmem:[#allocation8 + $0x6c] sm:$0xf]
    %v2690 = vld [vmem:[#allocation8 + $0x70] sm:$0xf]
    %v2691 = vld [vmem:[#allocation8 + $0x74] sm:$0xf]
    %v2692 = vld [vmem:[#allocation8 + $0x78] sm:$0xf]
    %v2693 = vld [vmem:[#allocation8 + $0x7c] sm:$0xf]
    %v2694 = vld [vmem:[#allocation8 + $0x80] sm:$0xf]
    %v2695 = vld [vmem:[#allocation8 + $0x84] sm:$0xf]
    %v2696 = vld [vmem:[#allocation8 + $0x88] sm:$0xf]
    %v2697 = vld [vmem:[#allocation8 + $0x8c] sm:$0xf]
    %v2698 = vld [vmem:[#allocation8 + $0x90] sm:$0xf]
    %v2699 = vld [vmem:[#allocation8 + $0x94] sm:$0xf]
    %v2700 = vld [vmem:[#allocation8 + $0x98] sm:$0xf]
    %v2701 = vld [vmem:[#allocation8 + $0x9c] sm:$0xf]
    %v2702 = vld [vmem:[#allocation8 + $0xa0] sm:$0xf]
    %v2703 = vld [vmem:[#allocation8 + $0xa4] sm:$0xf]
    %v2704 = vld [vmem:[#allocation8 + $0xa8] sm:$0xf]
    %v2705 = vld [vmem:[#allocation8 + $0xac] sm:$0xf]
    %v2706 = vld [vmem:[#allocation8 + $0xb0] sm:$0xf]
    %v2707 = vld [vmem:[#allocation8 + $0xb4] sm:$0xf]
    %v2708 = vld [vmem:[#allocation8 + $0xb8] sm:$0xf]
    %v2709 = vld [vmem:[#allocation8 + $0xbc] sm:$0xf]
    %v2710 = vld [vmem:[#allocation8 + $0xc0] sm:$0xf]
    %v2711 = vld [vmem:[#allocation8 + $0xc4] sm:$0xf]
    %v2712 = vld [vmem:[#allocation8 + $0xc8] sm:$0xf]
    %v2713 = vld [vmem:[#allocation8 + $0xcc] sm:$0xf]
    %v2714 = vld [vmem:[#allocation8 + $0xd0] sm:$0xf]
    %v2715 = vld [vmem:[#allocation8 + $0xd4] sm:$0xf]
    %v2716 = vld [vmem:[#allocation8 + $0xd8] sm:$0xf]
    %v2717 = vld [vmem:[#allocation8 + $0xdc] sm:$0xf]
    %v2718 = vld [vmem:[#allocation8 + $0xe0] sm:$0xf]
    %v2719 = vld [vmem:[#allocation8 + $0xe4] sm:$0xf]
    %v2720 = vld [vmem:[#allocation8 + $0xe8] sm:$0xf]
    %v2721 = vld [vmem:[#allocation8 + $0xec] sm:$0xf]
    %v2722 = vld [vmem:[#allocation8 + $0xf0] sm:$0xf]
    %v2723 = vld [vmem:[#allocation8 + $0xf4] sm:$0xf]
    %v2724 = vld [vmem:[#allocation8 + $0xf8] sm:$0xf]
    %v2725 = vld [vmem:[#allocation8 + $0xfc] sm:$0xf]
    %v2726 = vld [vmem:[#allocation8 + $0x100] sm:$0xf]
    %v2727 = vld [vmem:[#allocation8 + $0x104] sm:$0xf]
    %v2728 = vld [vmem:[#allocation8 + $0x108] sm:$0xf]
    %v2729 = vld [vmem:[#allocation8 + $0x10c] sm:$0xf]
    %v2730 = vld [vmem:[#allocation8 + $0x110] sm:$0xf]
    %v2731 = vld [vmem:[#allocation8 + $0x114] sm:$0xf]
    %v2732 = vld [vmem:[#allocation8 + $0x118] sm:$0xf]
    %v2733 = vld [vmem:[#allocation8 + $0x11c] sm:$0xf]
    %v2734 = vld [vmem:[#allocation8 + $0x120] sm:$0xf]
    %v2735 = vld [vmem:[#allocation8 + $0x124] sm:$0xf]
    %v2736 = vld [vmem:[#allocation8 + $0x128] sm:$0xf]
    %v2737 = vld [vmem:[#allocation8 + $0x12c] sm:$0xf]
    %v2738 = vld [vmem:[#allocation8 + $0x130] sm:$0xf]
    %v2739 = vld [vmem:[#allocation8 + $0x134] sm:$0xf]
    %v2740 = vld [vmem:[#allocation8 + $0x138] sm:$0xf]
    %v2741 = vld [vmem:[#allocation8 + $0x13c] sm:$0xf]
    %v2742 = vld [vmem:[#allocation8 + $0x140] sm:$0xf]
    %v2743 = vld [vmem:[#allocation8 + $0x144] sm:$0xf]
    %v2744 = vld [vmem:[#allocation8 + $0x148] sm:$0xf]
    %v2745 = vld [vmem:[#allocation8 + $0x14c] sm:$0xf]
    %v2746 = vld [vmem:[#allocation8 + $0x150] sm:$0xf]
    %v2747 = vld [vmem:[#allocation8 + $0x154] sm:$0xf]
    %v2748 = vld [vmem:[#allocation8 + $0x158] sm:$0xf]
    %v2749 = vld [vmem:[#allocation8 + $0x15c] sm:$0xf]
    %v2750 = vld [vmem:[#allocation8 + $0x160] sm:$0xf]
    %v2751 = vld [vmem:[#allocation8 + $0x164] sm:$0xf]
    %v2752 = vld [vmem:[#allocation8 + $0x168] sm:$0xf]
    %v2753 = vld [vmem:[#allocation8 + $0x16c] sm:$0xf]
    %v2754 = vld [vmem:[#allocation8 + $0x170] sm:$0xf]
    %v2755 = vld [vmem:[#allocation8 + $0x174] sm:$0xf]
    %v2756 = vld [vmem:[#allocation8 + $0x178] sm:$0xf]
    %v2757 = vld [vmem:[#allocation8 + $0x17c] sm:$0xf]
    %v2758 = vld [vmem:[#allocation8 + $0x180] sm:$0xf]
    %v2759 = vld [vmem:[#allocation8 + $0x184] sm:$0xf]
    %v2760 = vld [vmem:[#allocation8 + $0x188] sm:$0xf]
    %v2761 = vld [vmem:[#allocation8 + $0x18c] sm:$0xf]
    %v2762 = vld [vmem:[#allocation8 + $0x190] sm:$0xf]
    %v2763 = vld [vmem:[#allocation8 + $0x194] sm:$0xf]
    %v2764 = vld [vmem:[#allocation8 + $0x198] sm:$0xf]
    %v2765 = vld [vmem:[#allocation8 + $0x19c] sm:$0xf]
    %v2766 = vld [vmem:[#allocation8 + $0x1a0] sm:$0xf]
    %v2767 = vld [vmem:[#allocation8 + $0x1a4] sm:$0xf]
    %v2768 = vld [vmem:[#allocation8 + $0x1a8] sm:$0xf]
    %v2769 = vld [vmem:[#allocation8 + $0x1ac] sm:$0xf]
    %v2770 = vld [vmem:[#allocation8 + $0x1b0] sm:$0xf]
    %v2771 = vld [vmem:[#allocation8 + $0x1b4] sm:$0xf]
    %v2772 = vld [vmem:[#allocation8 + $0x1b8] sm:$0xf]
    %v2773 = vld [vmem:[#allocation8 + $0x1bc] sm:$0xf]
    %v2774 = vld [vmem:[#allocation8 + $0x1c0] sm:$0xf]
    %v2775 = vld [vmem:[#allocation8 + $0x1c4] sm:$0xf]
    %v2776 = vld [vmem:[#allocation8 + $0x1c8] sm:$0xf]
    %v2777 = vld [vmem:[#allocation8 + $0x1cc] sm:$0xf]
    %v2778 = vld [vmem:[#allocation8 + $0x1d0] sm:$0xf]
    %v2779 = vld [vmem:[#allocation8 + $0x1d4] sm:$0xf]
    %v2780 = vld [vmem:[#allocation8 + $0x1d8] sm:$0xf]
    %v2781 = vld [vmem:[#allocation8 + $0x1dc] sm:$0xf]
    %v2782 = vld [vmem:[#allocation8 + $0x1e0] sm:$0xf]
    %v2783 = vld [vmem:[#allocation8 + $0x1e4] sm:$0xf]
    %v2784 = vld [vmem:[#allocation8 + $0x1e8] sm:$0xf]
    %v2785 = vld [vmem:[#allocation8 + $0x1ec] sm:$0xf]
    %v2786 = vld [vmem:[#allocation8 + $0x1f0] sm:$0xf]
    %v2787 = vld [vmem:[#allocation8 + $0x1f4] sm:$0xf]
    %v2788 = vld [vmem:[#allocation8 + $0x1f8] sm:$0xf]
    %v2789 = vld [vmem:[#allocation8 + $0x1fc] sm:$0xf]
    %v2790 = vld [vmem:[%s8] sm:$0x1]
    %v2792 = vlaneseq
    %v2793 = vshrl.u32 %v2792, 7
    %v2794 = vsub.s32 0, %v2793
    %v2795 = vrot.slane %v2790, %v2794
    %v2925 = vunpack.c.l.b16 %v2662
    %v2926 = vunpack.c.l.b16 %v2663
    %v2927 = vunpack.c.l.b16 %v2664
    %v2928 = vunpack.c.l.b16 %v2665
    %v2929 = vunpack.c.l.b16 %v2666
    %v2930 = vunpack.c.l.b16 %v2667
    %v2931 = vunpack.c.l.b16 %v2668
    %v2932 = vunpack.c.l.b16 %v2669
    %v2933 = vunpack.c.l.b16 %v2670
    %v2934 = vunpack.c.l.b16 %v2671
    %v2935 = vunpack.c.l.b16 %v2672
    %v2936 = vunpack.c.l.b16 %v2673
    %v2937 = vunpack.c.l.b16 %v2674
    %v2938 = vunpack.c.l.b16 %v2675
    %v2939 = vunpack.c.l.b16 %v2676
    %v2940 = vunpack.c.l.b16 %v2677
    %v2941 = vunpack.c.l.b16 %v2678
    %v2942 = vunpack.c.l.b16 %v2679
    %v2943 = vunpack.c.l.b16 %v2680
    %v2944 = vunpack.c.l.b16 %v2681
    %v2945 = vunpack.c.l.b16 %v2682
    %v2946 = vunpack.c.l.b16 %v2683
    %v2947 = vunpack.c.l.b16 %v2684
    %v2948 = vunpack.c.l.b16 %v2685
    %v2949 = vunpack.c.l.b16 %v2686
    %v2950 = vunpack.c.l.b16 %v2687
    %v2951 = vunpack.c.l.b16 %v2688
    %v2952 = vunpack.c.l.b16 %v2689
    %v2953 = vunpack.c.l.b16 %v2690
    %v2954 = vunpack.c.l.b16 %v2691
    %v2955 = vunpack.c.l.b16 %v2692
    %v2956 = vunpack.c.l.b16 %v2693
    %v2957 = vunpack.c.l.b16 %v2694
    %v2958 = vunpack.c.l.b16 %v2695
    %v2959 = vunpack.c.l.b16 %v2696
    %v2960 = vunpack.c.l.b16 %v2697
    %v2961 = vunpack.c.l.b16 %v2698
    %v2962 = vunpack.c.l.b16 %v2699
    %v2963 = vunpack.c.l.b16 %v2700
    %v2964 = vunpack.c.l.b16 %v2701
    %v2965 = vunpack.c.l.b16 %v2702
    %v2966 = vunpack.c.l.b16 %v2703
    %v2967 = vunpack.c.l.b16 %v2704
    %v2968 = vunpack.c.l.b16 %v2705
    %v2969 = vunpack.c.l.b16 %v2706
    %v2970 = vunpack.c.l.b16 %v2707
    %v2971 = vunpack.c.l.b16 %v2708
    %v2972 = vunpack.c.l.b16 %v2709
    %v2973 = vunpack.c.l.b16 %v2710
    %v2974 = vunpack.c.l.b16 %v2711
    %v2975 = vunpack.c.l.b16 %v2712
    %v2976 = vunpack.c.l.b16 %v2713
    %v2977 = vunpack.c.l.b16 %v2714
    %v2978 = vunpack.c.l.b16 %v2715
    %v2979 = vunpack.c.l.b16 %v2716
    %v2980 = vunpack.c.l.b16 %v2717
    %v2981 = vunpack.c.l.b16 %v2718
    %v2982 = vunpack.c.l.b16 %v2719
    %v2983 = vunpack.c.l.b16 %v2720
    %v2984 = vunpack.c.l.b16 %v2721
    %v2985 = vunpack.c.l.b16 %v2722
    %v2986 = vunpack.c.l.b16 %v2723
    %v2987 = vunpack.c.l.b16 %v2724
    %v2988 = vunpack.c.l.b16 %v2725
    %v2989 = vunpack.c.l.b16 %v2726
    %v2990 = vunpack.c.l.b16 %v2727
    %v2991 = vunpack.c.l.b16 %v2728
    %v2992 = vunpack.c.l.b16 %v2729
    %v2993 = vunpack.c.l.b16 %v2730
    %v2994 = vunpack.c.l.b16 %v2731
    %v2995 = vunpack.c.l.b16 %v2732
    %v2996 = vunpack.c.l.b16 %v2733
    %v2997 = vunpack.c.l.b16 %v2734
    %v2998 = vunpack.c.l.b16 %v2735
    %v2999 = vunpack.c.l.b16 %v2736
    %v3000 = vunpack.c.l.b16 %v2737
    %v3001 = vunpack.c.l.b16 %v2738
    %v3002 = vunpack.c.l.b16 %v2739
    %v3003 = vunpack.c.l.b16 %v2740
    %v3004 = vunpack.c.l.b16 %v2741
    %v3005 = vunpack.c.l.b16 %v2742
    %v3006 = vunpack.c.l.b16 %v2743
    %v3007 = vunpack.c.l.b16 %v2744
    %v3008 = vunpack.c.l.b16 %v2745
    %v3009 = vunpack.c.l.b16 %v2746
    %v3010 = vunpack.c.l.b16 %v2747
    %v3011 = vunpack.c.l.b16 %v2748
    %v3012 = vunpack.c.l.b16 %v2749
    %v3013 = vunpack.c.l.b16 %v2750
    %v3014 = vunpack.c.l.b16 %v2751
    %v3015 = vunpack.c.l.b16 %v2752
    %v3016 = vunpack.c.l.b16 %v2753
    %v3017 = vunpack.c.l.b16 %v2754
    %v3018 = vunpack.c.l.b16 %v2755
    %v3019 = vunpack.c.l.b16 %v2756
    %v3020 = vunpack.c.l.b16 %v2757
    %v3021 = vunpack.c.l.b16 %v2758
    %v3022 = vunpack.c.l.b16 %v2759
    %v3023 = vunpack.c.l.b16 %v2760
    %v3024 = vunpack.c.l.b16 %v2761
    %v3025 = vunpack.c.l.b16 %v2762
    %v3026 = vunpack.c.l.b16 %v2763
    %v3027 = vunpack.c.l.b16 %v2764
    %v3028 = vunpack.c.l.b16 %v2765
    %v3029 = vunpack.c.l.b16 %v2766
    %v3030 = vunpack.c.l.b16 %v2767
    %v3031 = vunpack.c.l.b16 %v2768
    %v3032 = vunpack.c.l.b16 %v2769
    %v3033 = vunpack.c.l.b16 %v2770
    %v3034 = vunpack.c.l.b16 %v2771
    %v3035 = vunpack.c.l.b16 %v2772
    %v3036 = vunpack.c.l.b16 %v2773
    %v3037 = vunpack.c.l.b16 %v2774
    %v3038 = vunpack.c.l.b16 %v2775
    %v3039 = vunpack.c.l.b16 %v2776
    %v3040 = vunpack.c.l.b16 %v2777
    %v3041 = vunpack.c.l.b16 %v2778
    %v3042 = vunpack.c.l.b16 %v2779
    %v3043 = vunpack.c.l.b16 %v2780
    %v3044 = vunpack.c.l.b16 %v2781
    %v3045 = vunpack.c.l.b16 %v2782
    %v3046 = vunpack.c.l.b16 %v2783
    %v3047 = vunpack.c.l.b16 %v2784
    %v3048 = vunpack.c.l.b16 %v2785
    %v3049 = vunpack.c.l.b16 %v2786
    %v3050 = vunpack.c.l.b16 %v2787
    %v3051 = vunpack.c.l.b16 %v2788
    %v3052 = vunpack.c.l.b16 %v2789
    %v3053 = vpack.c.b16 %v2926, %v2925
    %v3054 = vpack.c.b16 %v2928, %v2927
    %v3055 = vpack.c.b16 %v2930, %v2929
    %v3056 = vpack.c.b16 %v2932, %v2931
    %v3057 = vpack.c.b16 %v2934, %v2933
    %v3058 = vpack.c.b16 %v2936, %v2935
    %v3059 = vpack.c.b16 %v2938, %v2937
    %v3060 = vpack.c.b16 %v2940, %v2939
    %v3061 = vpack.c.b16 %v2942, %v2941
    %v3062 = vpack.c.b16 %v2944, %v2943
    %v3063 = vpack.c.b16 %v2946, %v2945
    %v3064 = vpack.c.b16 %v2948, %v2947
    %v3065 = vpack.c.b16 %v2950, %v2949
    %v3066 = vpack.c.b16 %v2952, %v2951
    %v3067 = vpack.c.b16 %v2954, %v2953
    %v3068 = vpack.c.b16 %v2956, %v2955
    %v3069 = vpack.c.b16 %v2958, %v2957
    %v3070 = vpack.c.b16 %v2960, %v2959
    %v3071 = vpack.c.b16 %v2962, %v2961
    %v3072 = vpack.c.b16 %v2964, %v2963
    %v3073 = vpack.c.b16 %v2966, %v2965
    %v3074 = vpack.c.b16 %v2968, %v2967
    %v3075 = vpack.c.b16 %v2970, %v2969
    %v3076 = vpack.c.b16 %v2972, %v2971
    %v3077 = vpack.c.b16 %v2974, %v2973
    %v3078 = vpack.c.b16 %v2976, %v2975
    %v3079 = vpack.c.b16 %v2978, %v2977
    %v3080 = vpack.c.b16 %v2980, %v2979
    %v3081 = vpack.c.b16 %v2982, %v2981
    %v3082 = vpack.c.b16 %v2984, %v2983
    %v3083 = vpack.c.b16 %v2986, %v2985
    %v3084 = vpack.c.b16 %v2988, %v2987
    %v3085 = vpack.c.b16 %v2990, %v2989
    %v3086 = vpack.c.b16 %v2992, %v2991
    %v3087 = vpack.c.b16 %v2994, %v2993
    %v3088 = vpack.c.b16 %v2996, %v2995
    %v3089 = vpack.c.b16 %v2998, %v2997
    %v3090 = vpack.c.b16 %v3000, %v2999
    %v3091 = vpack.c.b16 %v3002, %v3001
    %v3092 = vpack.c.b16 %v3004, %v3003
    %v3093 = vpack.c.b16 %v3006, %v3005
    %v3094 = vpack.c.b16 %v3008, %v3007
    %v3095 = vpack.c.b16 %v3010, %v3009
    %v3096 = vpack.c.b16 %v3012, %v3011
    %v3097 = vpack.c.b16 %v3014, %v3013
    %v3098 = vpack.c.b16 %v3016, %v3015
    %v3099 = vpack.c.b16 %v3018, %v3017
    %v3100 = vpack.c.b16 %v3020, %v3019
    %v3101 = vpack.c.b16 %v3022, %v3021
    %v3102 = vpack.c.b16 %v3024, %v3023
    %v3103 = vpack.c.b16 %v3026, %v3025
    %v3104 = vpack.c.b16 %v3028, %v3027
    %v3105 = vpack.c.b16 %v3030, %v3029
    %v3106 = vpack.c.b16 %v3032, %v3031
    %v3107 = vpack.c.b16 %v3034, %v3033
    %v3108 = vpack.c.b16 %v3036, %v3035
    %v3109 = vpack.c.b16 %v3038, %v3037
    %v3110 = vpack.c.b16 %v3040, %v3039
    %v3111 = vpack.c.b16 %v3042, %v3041
    %v3112 = vpack.c.b16 %v3044, %v3043
    %v3113 = vpack.c.b16 %v3046, %v3045
    %v3114 = vpack.c.b16 %v3048, %v3047
    %v3115 = vpack.c.b16 %v3050, %v3049
    %v3116 = vpack.c.b16 %v3052, %v3051
    %3181 = vmatprep.subr.bf16.mxu0 0
    %3182 = vmatpush1.bf16.msra.mxu0 %v3053
    %3183 = vmatprep.subr.bf16.mxu0 0
    %3184 = vmatpush1.bf16.msra.mxu0 %v3054
    %3185 = vmatprep.subr.bf16.mxu0 0
    %3186 = vmatpush1.bf16.msra.mxu0 %v3055
    %3187 = vmatprep.subr.bf16.mxu0 0
    %3188 = vmatpush1.bf16.msra.mxu0 %v3056
    %3189 = vmatprep.subr.bf16.mxu0 0
    %3190 = vmatpush1.bf16.msra.mxu0 %v3057
    %3191 = vmatprep.subr.bf16.mxu0 0
    %3192 = vmatpush1.bf16.msra.mxu0 %v3058
    %3193 = vmatprep.subr.bf16.mxu0 0
    %3194 = vmatpush1.bf16.msra.mxu0 %v3059
    %3195 = vmatprep.subr.bf16.mxu0 0
    %3196 = vmatpush1.bf16.msra.mxu0 %v3060
    %3197 = vmatprep.subr.bf16.mxu0 0
    %3198 = vmatpush1.bf16.msra.mxu0 %v3061
    %3199 = vmatprep.subr.bf16.mxu0 0
    %3200 = vmatpush1.bf16.msra.mxu0 %v3062
    %3201 = vmatprep.subr.bf16.mxu0 0
    %3202 = vmatpush1.bf16.msra.mxu0 %v3063
    %3203 = vmatprep.subr.bf16.mxu0 0
    %3204 = vmatpush1.bf16.msra.mxu0 %v3064
    %3205 = vmatprep.subr.bf16.mxu0 0
    %3206 = vmatpush1.bf16.msra.mxu0 %v3065
    %3207 = vmatprep.subr.bf16.mxu0 0
    %3208 = vmatpush1.bf16.msra.mxu0 %v3066
    %3209 = vmatprep.subr.bf16.mxu0 0
    %3210 = vmatpush1.bf16.msra.mxu0 %v3067
    %3211 = vmatprep.subr.bf16.mxu0 0
    %3212 = vmatpush1.bf16.msra.mxu0 %v3068
    %3213 = vmatprep.mubr.bf16.mxu0 %v2655
    %3214 = vmatmul.mubr.bf16.gmra.mrb[0].mxu0 %v2654
    %v3215 = vpop.f32.mrb[0].mxu0
    %v3216 = vadd.f32 %v2795, %v3215
    %v3217 = vpop.f32.mrb[0].mxu0
    %v3218 = vpop.f32.mrb[0].mxu0
    %v3219 = vpop.f32.mrb[0].mxu0
    %3220 = vdwg.mxu0
    %3221 = vmatprep.subr.bf16.mxu0 0
    %3222 = vmatpush1.bf16.msra.mxu0 %v3069
    %3223 = vmatprep.subr.bf16.mxu0 0
    %3224 = vmatpush1.bf16.msra.mxu0 %v3070
    %3225 = vmatprep.subr.bf16.mxu0 0
    %3226 = vmatpush1.bf16.msra.mxu0 %v3071
    %3227 = vmatprep.subr.bf16.mxu0 0
    %3228 = vmatpush1.bf16.msra.mxu0 %v3072
    %3229 = vmatprep.subr.bf16.mxu0 0
    %3230 = vmatpush1.bf16.msra.mxu0 %v3073
    %3231 = vmatprep.subr.bf16.mxu0 0
    %3232 = vmatpush1.bf16.msra.mxu0 %v3074
    %3233 = vmatprep.subr.bf16.mxu0 0
    %3234 = vmatpush1.bf16.msra.mxu0 %v3075
    %3235 = vmatprep.subr.bf16.mxu0 0
    %3236 = vmatpush1.bf16.msra.mxu0 %v3076
    %3237 = vmatprep.subr.bf16.mxu0 0
    %3238 = vmatpush1.bf16.msra.mxu0 %v3077
    %3239 = vmatprep.subr.bf16.mxu0 0
    %3240 = vmatpush1.bf16.msra.mxu0 %v3078
    %3241 = vmatprep.subr.bf16.mxu0 0
    %3242 = vmatpush1.bf16.msra.mxu0 %v3079
    %3243 = vmatprep.subr.bf16.mxu0 0
    %3244 = vmatpush1.bf16.msra.mxu0 %v3080
    %3245 = vmatprep.subr.bf16.mxu0 0
    %3246 = vmatpush1.bf16.msra.mxu0 %v3081
    %3247 = vmatprep.subr.bf16.mxu0 0
    %3248 = vmatpush1.bf16.msra.mxu0 %v3082
    %3249 = vmatprep.subr.bf16.mxu0 0
    %3250 = vmatpush1.bf16.msra.mxu0 %v3083
    %3251 = vmatprep.subr.bf16.mxu0 0
    %3252 = vmatpush1.bf16.msra.mxu0 %v3084
    %3253 = vmatprep.mubr.bf16.mxu0 %v2657
    %3254 = vmatmul.mubr.bf16.gmra.mrb[0].mxu0 %v2656
    %v3255 = vpop.f32.mrb[0].mxu0
    %v3256 = vadd.f32 %v3216, %v3255
    %v3257 = vpop.f32.mrb[0].mxu0
    %v3258 = vpop.f32.mrb[0].mxu0
    %v3259 = vpop.f32.mrb[0].mxu0
    %3260 = vdwg.mxu0
    %3261 = vmatprep.subr.bf16.mxu0 0
    %3262 = vmatpush1.bf16.msra.mxu0 %v3085
    %3263 = vmatprep.subr.bf16.mxu0 0
    %3264 = vmatpush1.bf16.msra.mxu0 %v3086
    %3265 = vmatprep.subr.bf16.mxu0 0
    %3266 = vmatpush1.bf16.msra.mxu0 %v3087
    %3267 = vmatprep.subr.bf16.mxu0 0
    %3268 = vmatpush1.bf16.msra.mxu0 %v3088
    %3269 = vmatprep.subr.bf16.mxu0 0
    %3270 = vmatpush1.bf16.msra.mxu0 %v3089
    %3271 = vmatprep.subr.bf16.mxu0 0
    %3272 = vmatpush1.bf16.msra.mxu0 %v3090
    %3273 = vmatprep.subr.bf16.mxu0 0
    %3274 = vmatpush1.bf16.msra.mxu0 %v3091
    %3275 = vmatprep.subr.bf16.mxu0 0
    %3276 = vmatpush1.bf16.msra.mxu0 %v3092
    %3277 = vmatprep.subr.bf16.mxu0 0
    %3278 = vmatpush1.bf16.msra.mxu0 %v3093
    %3279 = vmatprep.subr.bf16.mxu0 0
    %3280 = vmatpush1.bf16.msra.mxu0 %v3094
    %3281 = vmatprep.subr.bf16.mxu0 0
    %3282 = vmatpush1.bf16.msra.mxu0 %v3095
    %3283 = vmatprep.subr.bf16.mxu0 0
    %3284 = vmatpush1.bf16.msra.mxu0 %v3096
    %3285 = vmatprep.subr.bf16.mxu0 0
    %3286 = vmatpush1.bf16.msra.mxu0 %v3097
    %3287 = vmatprep.subr.bf16.mxu0 0
    %3288 = vmatpush1.bf16.msra.mxu0 %v3098
    %3289 = vmatprep.subr.bf16.mxu0 0
    %3290 = vmatpush1.bf16.msra.mxu0 %v3099
    %3291 = vmatprep.subr.bf16.mxu0 0
    %3292 = vmatpush1.bf16.msra.mxu0 %v3100
    %3293 = vmatprep.mubr.bf16.mxu0 %v2659
    %3294 = vmatmul.mubr.bf16.gmra.mrb[0].mxu0 %v2658
    %v3295 = vpop.f32.mrb[0].mxu0
    %v3296 = vadd.f32 %v3256, %v3295
    %v3297 = vpop.f32.mrb[0].mxu0
    %v3298 = vpop.f32.mrb[0].mxu0
    %v3299 = vpop.f32.mrb[0].mxu0
    %3300 = vdwg.mxu0
    %3301 = vmatprep.subr.bf16.mxu0 0
    %3302 = vmatpush1.bf16.msra.mxu0 %v3101
    %3303 = vmatprep.subr.bf16.mxu0 0
    %3304 = vmatpush1.bf16.msra.mxu0 %v3102
    %3305 = vmatprep.subr.bf16.mxu0 0
    %3306 = vmatpush1.bf16.msra.mxu0 %v3103
    %3307 = vmatprep.subr.bf16.mxu0 0
    %3308 = vmatpush1.bf16.msra.mxu0 %v3104
    %3309 = vmatprep.subr.bf16.mxu0 0
    %3310 = vmatpush1.bf16.msra.mxu0 %v3105
    %3311 = vmatprep.subr.bf16.mxu0 0
    %3312 = vmatpush1.bf16.msra.mxu0 %v3106
    %3313 = vmatprep.subr.bf16.mxu0 0
    %3314 = vmatpush1.bf16.msra.mxu0 %v3107
    %3315 = vmatprep.subr.bf16.mxu0 0
    %3316 = vmatpush1.bf16.msra.mxu0 %v3108
    %3317 = vmatprep.subr.bf16.mxu0 0
    %3318 = vmatpush1.bf16.msra.mxu0 %v3109
    %3319 = vmatprep.subr.bf16.mxu0 0
    %3320 = vmatpush1.bf16.msra.mxu0 %v3110
    %3321 = vmatprep.subr.bf16.mxu0 0
    %3322 = vmatpush1.bf16.msra.mxu0 %v3111
    %3323 = vmatprep.subr.bf16.mxu0 0
    %3324 = vmatpush1.bf16.msra.mxu0 %v3112
    %3325 = vmatprep.subr.bf16.mxu0 0
    %3326 = vmatpush1.bf16.msra.mxu0 %v3113
    %3327 = vmatprep.subr.bf16.mxu0 0
    %3328 = vmatpush1.bf16.msra.mxu0 %v3114
    %3329 = vmatprep.subr.bf16.mxu0 0
    %3330 = vmatpush1.bf16.msra.mxu0 %v3115
    %3331 = vmatprep.subr.bf16.mxu0 0
    %3332 = vmatpush1.bf16.msra.mxu0 %v3116
    %3333 = vmatprep.mubr.bf16.mxu0 %v2661
    %3334 = vmatmul.mubr.bf16.gmra.mrb[0].mxu0 %v2660
    %v3335 = vpop.f32.mrb[0].mxu0
    %v3336 = vadd.f32 %v3296, %v3335
    %v3337 = vpop.f32.mrb[0].mxu0
    %v3338 = vpop.f32.mrb[0].mxu0
    %v3339 = vpop.f32.mrb[0].mxu0
    %3340 = vdwg.mxu0
    %v3341 = vxor.u32 %v3336, 2147483648
    %v3342 = vmul.f32 %v3341, 1.442695
    %v3343 = vpow.pop %v3342
    %v3344 = vadd.f32 %v3343, 1.0
    %v3345 = vrcp.pop %v3344
    %v3346 = vmul.f32 1.0, %v3345
    %3347 = vst [vmem:[#allocation10] sm:$0xff] %v3346
    // Predicated region
    $region54: #{conv_generator_forward.1} parent=1 // pred_check
      _
    $region55: #{conv_generator_forward.1} parent=1 // pred_check_branch
      %3349 = sbr.rel (0) target = $region57
    $region56: #{conv_generator_forward.1} parent=1 // pred_region
      %s3351 = ssub.s32 128, 128
      %3352 = vsyncadd [#allocation4], %s3351
      %s3354 = sshll.u32 [#allocation10], 4
      %s3355 = int_to_ptr.vmem [resolvable:$true] %s3354
      %3357 = dma.vmem_to_hbm [thread:$0]  %s3355, 128, %s9, [#allocation4]
    $region57: #{conv_generator_forward.1} parent=1 // pred_fallthru
      _
    // Predicated region
    $region58: #{conv_generator_forward.1} parent=1 // pred_check
      _
    $region59: #{conv_generator_forward.1} parent=1 // pred_check_branch
      %3359 = sbr.rel (0) target = $region61
    $region60: #{conv_generator_forward.1} parent=1 // pred_region
      %3360 = dma.done [#allocation4], 128
    $region61: #{conv_generator_forward.1} parent=1 // pred_fallthru
      _
    %3361 = vsyncpa [#allocation3], 1
    %3362 = vsyncpa [#allocation6], 1
    %3363 = vsyncpa [#allocation9], 1
    %3364 = vsyncpa [#allocation4], 1

</llo_original>
